<compile_context>
chip_gen: v7x
topology: tpu7x:2x2x1
jax: 0.10.0
libtpu: 0.0.40
codegen_flags: <defaults>
</compile_context>

<pallas_src>
import functools

import jax
import jax.numpy as jnp
import numpy as np
from jax.experimental import pallas as pl
from jax.experimental.pallas import tpu as pltpu


def fire_kernel(xT_ref, coords_ref, wsq_ref, bsq_ref, we1_ref, be1_ref,
                we3_ref, be3_ref, out_ref, *, H, W):
    """One batch-chunk per grid step; batch*spatial on the 128-lane axis.

    xT_ref     : (Cin, Mc)         Mc = (N / grid) * H * W, lane-major
    coords_ref : (2, Mc) int32     row 0 = y coordinate, row 1 = x coordinate
    wsq_ref    : (Csq, Cin)        squeeze 1x1 weight (out, in)
    bsq_ref    : (Csq, 1)
    we1_ref    : (Ce1, Csq)        expand1x1 weight (out, in)
    be1_ref    : (Ce1, 1)
    we3_ref    : (3, 3, Ce3, Csq)  expand3x3 weight (kh, kw, out, in)
    be3_ref    : (Ce3, 1)
    out_ref    : (Ce1 + Ce3, Mc)   fused [expand1x1 ; expand3x3] output
    """
    Mc = xT_ref.shape[1]
    Ce1 = we1_ref.shape[0]
    Ce3 = we3_ref.shape[2]

    # ---- squeeze: 1x1 conv == channel matmul + bias + ReLU ----
    x = xT_ref[...]                                             # (Cin, Mc)
    s = jnp.dot(wsq_ref[...], x, preferred_element_type=jnp.float32)
    s = jnp.maximum(s + bsq_ref[...], 0.0)                      # (Csq, Mc)

    # ---- expand1x1: 1x1 conv + bias + ReLU (lane-dense) ----
    e1 = jnp.dot(we1_ref[...], s, preferred_element_type=jnp.float32)
    e1 = jnp.maximum(e1 + be1_ref[...], 0.0)                    # (Ce1, Mc)

    # ---- expand3x3: padding=1 conv as 9 whole-image per-tap matmuls ----
    # Lane j holds pixel (n, y, x) with y = coords[0, j], x = coords[1, j].
    yy = coords_ref[0:1, :]                                     # (1, Mc)
    xx = coords_ref[1:2, :]                                     # (1, Mc)

    acc = jnp.zeros((Ce3, Mc), jnp.float32)
    for dy in (-1, 0, 1):
        for dx in (-1, 0, 1):
            shift = dy * W + dx
            # Output lane j needs s[:, j + shift]: an XLU lane roll; any
            # wrapped lanes land only at positions that the boundary mask
            # below zeroes out (== the conv's zero padding).
            s_tap = pltpu.roll(s, (-shift) % Mc, 1) if shift else s
            conds = []
            if dy < 0:
                conds.append(yy >= -dy)
            if dy > 0:
                conds.append(yy < H - dy)
            if dx < 0:
                conds.append(xx >= -dx)
            if dx > 0:
                conds.append(xx < W - dx)
            if conds:
                valid = functools.reduce(jnp.logical_and, conds)
                s_tap = jnp.where(valid, s_tap, 0.0)
            acc = acc + jnp.dot(we3_ref[dy + 1, dx + 1], s_tap,
                                preferred_element_type=jnp.float32)
    e3 = jnp.maximum(acc + be3_ref[...], 0.0)                   # (Ce3, Mc)

    # fused torch.cat(dim=1): two full-lane-width, sublane-aligned stores
    out_ref[0:Ce1, :] = e1
    out_ref[Ce1:Ce1 + Ce3, :] = e3


def fire_forward(x_nchw, params):
    """Fire forward pass.  x_nchw: (N, Cin, H, W) -> (N, Ce1 + Ce3, H, W)."""
    wsq_t, bsq, we1_t, be1, we3_t, be3 = params      # PyTorch OIHW layouts
    N, Cin, H, W = x_nchw.shape
    Csq = wsq_t.shape[0]
    Ce1 = we1_t.shape[0]
    Ce3 = we3_t.shape[0]
    M = N * H * W

    # glue: batch*spatial onto the lane axis, channels onto sublanes
    xT = jnp.transpose(x_nchw, (1, 0, 2, 3)).reshape(Cin, M)
    wsq = wsq_t[:, :, 0, 0]                          # (Csq, Cin)
    we1 = we1_t[:, :, 0, 0]                          # (Ce1, Csq)
    we3 = jnp.transpose(we3_t, (2, 3, 0, 1))         # (3, 3, Ce3, Csq)
    bsq2 = bsq.reshape(Csq, 1)
    be12 = be1.reshape(Ce1, 1)
    be32 = be3.reshape(Ce3, 1)

    # per-lane (y, x) coordinates, used in-kernel for the 3x3 boundary masks
    hw = np.arange(H * W, dtype=np.int32)
    coords = jnp.asarray(
        np.stack([np.tile(hw // W, N), np.tile(hw % W, N)], axis=0))  # (2, M)

    # Split the batch over a small parallel grid axis (keeps both v7x
    # TensorCores busy) as long as every chunk stays lane-aligned.
    G = 2 if (N % 2 == 0 and ((N // 2) * H * W) % 128 == 0) else 1
    Mc = M // G

    flops = 2 * M * Csq * (Cin + Ce1 + 9 * Ce3)
    bytes_accessed = 4 * (Cin * M + 2 * M + (Ce1 + Ce3) * M
                          + Csq * Cin + Ce1 * Csq + 9 * Ce3 * Csq
                          + Csq + Ce1 + Ce3)

    kernel = functools.partial(fire_kernel, H=H, W=W)
    out = pl.pallas_call(
        kernel,
        out_shape=jax.ShapeDtypeStruct((Ce1 + Ce3, M), jnp.float32),
        grid_spec=pltpu.PrefetchScalarGridSpec(
            num_scalar_prefetch=0,
            grid=(G,),
            in_specs=[
                pl.BlockSpec((Cin, Mc), lambda g: (0, g)),
                pl.BlockSpec((2, Mc), lambda g: (0, g)),
                pl.BlockSpec((Csq, Cin), lambda g: (0, 0)),
                pl.BlockSpec((Csq, 1), lambda g: (0, 0)),
                pl.BlockSpec((Ce1, Csq), lambda g: (0, 0)),
                pl.BlockSpec((Ce1, 1), lambda g: (0, 0)),
                pl.BlockSpec((3, 3, Ce3, Csq), lambda g: (0, 0, 0, 0)),
                pl.BlockSpec((Ce3, 1), lambda g: (0, 0)),
            ],
            out_specs=pl.BlockSpec((Ce1 + Ce3, Mc), lambda g: (0, g)),
        ),
        compiler_params=pltpu.CompilerParams(
            dimension_semantics=("parallel",)),
        cost_estimate=pl.CostEstimate(flops=flops, transcendentals=0,
                                      bytes_accessed=bytes_accessed),
    )(xT, coords, wsq, bsq2, we1, be12, we3, be32)

    # rows [0:Ce1] = expand1x1, [Ce1:] = expand3x3  == torch.cat(dim=1)
    return jnp.transpose(out.reshape(Ce1 + Ce3, N, H, W), (1, 0, 2, 3))


def fire_reference(x, params):
    """Pure-JAX/XLA reference (same semantics as the PyTorch module)."""
    wsq_t, bsq, we1_t, be1, we3_t, be3 = params
    dn = ('NCHW', 'OIHW', 'NCHW')
    s = jax.lax.conv_general_dilated(x, wsq_t, (1, 1), 'VALID',
                                     dimension_numbers=dn)
    s = jax.nn.relu(s + bsq.reshape(1, -1, 1, 1))
    e1 = jax.lax.conv_general_dilated(s, we1_t, (1, 1), 'VALID',
                                      dimension_numbers=dn)
    e1 = jax.nn.relu(e1 + be1.reshape(1, -1, 1, 1))
    e3 = jax.lax.conv_general_dilated(s, we3_t, (1, 1), ((1, 1), (1, 1)),
                                      dimension_numbers=dn)
    e3 = jax.nn.relu(e3 + be3.reshape(1, -1, 1, 1))
    return jnp.concatenate([e1, e3], axis=1)


if __name__ == "__main__":
    key = jax.random.PRNGKey(0)
    N, Cin, H, W = 2, 4, 16, 16        # Fire(inplanes=4, ...) on a 16x16 map
    Csq, Ce1, Ce3 = 8, 8, 8

    ks = jax.random.split(key, 7)
    x = jax.random.normal(ks[0], (N, Cin, H, W), jnp.float32)
    params = (
        jax.random.normal(ks[1], (Csq, Cin, 1, 1), jnp.float32) * 0.5,   # squeeze.weight
        jax.random.normal(ks[2], (Csq,), jnp.float32) * 0.1,             # squeeze.bias
        jax.random.normal(ks[3], (Ce1, Csq, 1, 1), jnp.float32) * 0.5,   # expand1x1.weight
        jax.random.normal(ks[4], (Ce1,), jnp.float32) * 0.1,             # expand1x1.bias
        jax.random.normal(ks[5], (Ce3, Csq, 3, 3), jnp.float32) * 0.2,   # expand3x3.weight
        jax.random.normal(ks[6], (Ce3,), jnp.float32) * 0.1,             # expand3x3.bias
    )

    out = jax.block_until_ready(fire_forward(x, params))
    ref = fire_reference(x, params)
    np.testing.assert_allclose(np.asarray(out), np.asarray(ref),
                               atol=3e-3, rtol=3e-3)
    assert out.shape == (N, Ce1 + Ce3, H, W)

    print("KERNEL_OK")
</pallas_src>

<mosaic_0001>
module attributes {stable_mosaic.version = 11 : i64} {
  func.func @fire_kernel(%arg0: i32, %arg1: memref<4x256xf32, #tpu.memory_space<vmem>>, %arg2: memref<2x256xi32, #tpu.memory_space<vmem>>, %arg3: memref<8x4xf32, #tpu.memory_space<vmem>>, %arg4: memref<8x1xf32, #tpu.memory_space<vmem>>, %arg5: memref<8x8xf32, #tpu.memory_space<vmem>>, %arg6: memref<8x1xf32, #tpu.memory_space<vmem>>, %arg7: memref<3x3x8x8xf32, #tpu.memory_space<vmem>>, %arg8: memref<8x1xf32, #tpu.memory_space<vmem>>, %arg9: memref<16x256xf32, #tpu.memory_space<vmem>>) attributes {dimension_semantics = [#tpu.dimension_semantics<parallel>], iteration_bounds = array<i64: 2>, scalar_prefetch = 0 : i64, scratch_operands = 0 : i64, tpu.core_type = #tpu.core_type<tc>, window_params = [{transform_indices = @transform_0, window_bounds = array<i64: 4, 256>}, {transform_indices = @transform_1, window_bounds = array<i64: 2, 256>}, {pipeline_mode = #tpu.pipeline_mode<synchronous>, transform_indices = @transform_2, window_bounds = array<i64: 8, 4>}, {pipeline_mode = #tpu.pipeline_mode<synchronous>, transform_indices = @transform_3, window_bounds = array<i64: 8, 1>}, {pipeline_mode = #tpu.pipeline_mode<synchronous>, transform_indices = @transform_4, window_bounds = array<i64: 8, 8>}, {pipeline_mode = #tpu.pipeline_mode<synchronous>, transform_indices = @transform_5, window_bounds = array<i64: 8, 1>}, {pipeline_mode = #tpu.pipeline_mode<synchronous>, transform_indices = @transform_6, window_bounds = array<i64: 3, 3, 8, 8>}, {pipeline_mode = #tpu.pipeline_mode<synchronous>, transform_indices = @transform_7, window_bounds = array<i64: 8, 1>}, {transform_indices = @transform_8, window_bounds = array<i64: 16, 256>}]} {
    %c0 = arith.constant 0 : index
    %c0_0 = arith.constant 0 : index
    %0 = vector.load %arg1[%c0, %c0_0] : memref<4x256xf32, #tpu.memory_space<vmem>>, vector<4x256xf32>
    %c0_1 = arith.constant 0 : index
    %c0_2 = arith.constant 0 : index
    %1 = vector.load %arg3[%c0_1, %c0_2] : memref<8x4xf32, #tpu.memory_space<vmem>>, vector<8x4xf32>
    %cst = arith.constant dense<0.000000e+00> : vector<8x256xf32>
    %2 = tpu.matmul %1, %0, %cst {dimension_numbers = #tpu.dot_dimension_numbers<[1], [0], [0], [1], [0, 0, 1, 1], [], []>} : vector<8x4xf32>, vector<4x256xf32>, vector<8x256xf32> -> vector<8x256xf32>
    %c0_3 = arith.constant 0 : index
    %c0_4 = arith.constant 0 : index
    %3 = vector.load %arg4[%c0_3, %c0_4] : memref<8x1xf32, #tpu.memory_space<vmem>>, vector<8x1xf32>
    %4 = vector.broadcast %3 : vector<8x1xf32> to vector<8x256xf32>
    %5 = arith.addf %2, %4 : vector<8x256xf32>
    %cst_5 = arith.constant 0.000000e+00 : f32
    %6 = vector.broadcast %cst_5 : f32 to vector<8x256xf32>
    %7 = arith.maximumf %5, %6 : vector<8x256xf32>
    %c0_6 = arith.constant 0 : index
    %c0_7 = arith.constant 0 : index
    %8 = vector.load %arg5[%c0_6, %c0_7] : memref<8x8xf32, #tpu.memory_space<vmem>>, vector<8x8xf32>
    %cst_8 = arith.constant dense<0.000000e+00> : vector<8x256xf32>
    %9 = tpu.matmul %8, %7, %cst_8 {dimension_numbers = #tpu.dot_dimension_numbers<[1], [0], [0], [1], [0, 0, 1, 1], [], []>} : vector<8x8xf32>, vector<8x256xf32>, vector<8x256xf32> -> vector<8x256xf32>
    %c0_9 = arith.constant 0 : index
    %c0_10 = arith.constant 0 : index
    %10 = vector.load %arg6[%c0_9, %c0_10] : memref<8x1xf32, #tpu.memory_space<vmem>>, vector<8x1xf32>
    %11 = vector.broadcast %10 : vector<8x1xf32> to vector<8x256xf32>
    %12 = arith.addf %9, %11 : vector<8x256xf32>
    %cst_11 = arith.constant 0.000000e+00 : f32
    %13 = vector.broadcast %cst_11 : f32 to vector<8x256xf32>
    %14 = arith.maximumf %12, %13 : vector<8x256xf32>
    %c0_12 = arith.constant 0 : index
    %c0_13 = arith.constant 0 : index
    %15 = vector.load %arg2[%c0_12, %c0_13] : memref<2x256xi32, #tpu.memory_space<vmem>>, vector<1x256xi32>
    %c1 = arith.constant 1 : index
    %c0_14 = arith.constant 0 : index
    %16 = vector.load %arg2[%c1, %c0_14] : memref<2x256xi32, #tpu.memory_space<vmem>>, vector<1x256xi32>
    %cst_15 = arith.constant 0.000000e+00 : f32
    %17 = vector.broadcast %cst_15 : f32 to vector<8x256xf32>
    %c17_i32 = arith.constant 17 : i32
    %18 = tpu.dynamic_rotate %7 by %c17_i32 dim 1 : vector<8x256xf32>, i32 -> vector<8x256xf32>
    %c1_i32 = arith.constant 1 : i32
    %19 = vector.broadcast %c1_i32 : i32 to vector<1x256xi32>
    %20 = arith.cmpi sge, %15, %19 : vector<1x256xi32>
    %c1_i32_16 = arith.constant 1 : i32
    %21 = vector.broadcast %c1_i32_16 : i32 to vector<1x256xi32>
    %22 = arith.cmpi sge, %16, %21 : vector<1x256xi32>
    %23 = arith.andi %20, %22 : vector<1x256xi1>
    %cst_17 = arith.constant 0.000000e+00 : f32
    %24 = vector.shape_cast %23 : vector<1x256xi1> to vector<1x256xi1>
    %25 = vector.broadcast %24 : vector<1x256xi1> to vector<8x256xi1>
    %26 = vector.broadcast %cst_17 : f32 to vector<8x256xf32>
    %27 = arith.select %25, %18, %26 : vector<8x256xi1>, vector<8x256xf32>
    %c0_18 = arith.constant 0 : index
    %c0_19 = arith.constant 0 : index
    %c0_20 = arith.constant 0 : index
    %c0_21 = arith.constant 0 : index
    %28 = vector.load %arg7[%c0_18, %c0_19, %c0_20, %c0_21] : memref<3x3x8x8xf32, #tpu.memory_space<vmem>>, vector<1x1x8x8xf32>
    %29 = vector.shape_cast %28 : vector<1x1x8x8xf32> to vector<8x8xf32>
    %cst_22 = arith.constant dense<0.000000e+00> : vector<8x256xf32>
    %30 = tpu.matmul %29, %27, %cst_22 {dimension_numbers = #tpu.dot_dimension_numbers<[1], [0], [0], [1], [0, 0, 1, 1], [], []>} : vector<8x8xf32>, vector<8x256xf32>, vector<8x256xf32> -> vector<8x256xf32>
    %31 = arith.addf %17, %30 : vector<8x256xf32>
    %c16_i32 = arith.constant 16 : i32
    %32 = tpu.dynamic_rotate %7 by %c16_i32 dim 1 : vector<8x256xf32>, i32 -> vector<8x256xf32>
    %c1_i32_23 = arith.constant 1 : i32
    %33 = vector.broadcast %c1_i32_23 : i32 to vector<1x256xi32>
    %34 = arith.cmpi sge, %15, %33 : vector<1x256xi32>
    %cst_24 = arith.constant 0.000000e+00 : f32
    %35 = vector.shape_cast %34 : vector<1x256xi1> to vector<1x256xi1>
    %36 = vector.broadcast %35 : vector<1x256xi1> to vector<8x256xi1>
    %37 = vector.broadcast %cst_24 : f32 to vector<8x256xf32>
    %38 = arith.select %36, %32, %37 : vector<8x256xi1>, vector<8x256xf32>
    %c0_25 = arith.constant 0 : index
    %c1_26 = arith.constant 1 : index
    %c0_27 = arith.constant 0 : index
    %c0_28 = arith.constant 0 : index
    %39 = vector.load %arg7[%c0_25, %c1_26, %c0_27, %c0_28] : memref<3x3x8x8xf32, #tpu.memory_space<vmem>>, vector<1x1x8x8xf32>
    %40 = vector.shape_cast %39 : vector<1x1x8x8xf32> to vector<8x8xf32>
    %cst_29 = arith.constant dense<0.000000e+00> : vector<8x256xf32>
    %41 = tpu.matmul %40, %38, %cst_29 {dimension_numbers = #tpu.dot_dimension_numbers<[1], [0], [0], [1], [0, 0, 1, 1], [], []>} : vector<8x8xf32>, vector<8x256xf32>, vector<8x256xf32> -> vector<8x256xf32>
    %42 = arith.addf %31, %41 : vector<8x256xf32>
    %c15_i32 = arith.constant 15 : i32
    %43 = tpu.dynamic_rotate %7 by %c15_i32 dim 1 : vector<8x256xf32>, i32 -> vector<8x256xf32>
    %c1_i32_30 = arith.constant 1 : i32
    %44 = vector.broadcast %c1_i32_30 : i32 to vector<1x256xi32>
    %45 = arith.cmpi sge, %15, %44 : vector<1x256xi32>
    %c15_i32_31 = arith.constant 15 : i32
    %46 = vector.broadcast %c15_i32_31 : i32 to vector<1x256xi32>
    %47 = arith.cmpi slt, %16, %46 : vector<1x256xi32>
    %48 = arith.andi %45, %47 : vector<1x256xi1>
    %cst_32 = arith.constant 0.000000e+00 : f32
    %49 = vector.shape_cast %48 : vector<1x256xi1> to vector<1x256xi1>
    %50 = vector.broadcast %49 : vector<1x256xi1> to vector<8x256xi1>
    %51 = vector.broadcast %cst_32 : f32 to vector<8x256xf32>
    %52 = arith.select %50, %43, %51 : vector<8x256xi1>, vector<8x256xf32>
    %c0_33 = arith.constant 0 : index
    %c2 = arith.constant 2 : index
    %c0_34 = arith.constant 0 : index
    %c0_35 = arith.constant 0 : index
    %53 = vector.load %arg7[%c0_33, %c2, %c0_34, %c0_35] : memref<3x3x8x8xf32, #tpu.memory_space<vmem>>, vector<1x1x8x8xf32>
    %54 = vector.shape_cast %53 : vector<1x1x8x8xf32> to vector<8x8xf32>
    %cst_36 = arith.constant dense<0.000000e+00> : vector<8x256xf32>
    %55 = tpu.matmul %54, %52, %cst_36 {dimension_numbers = #tpu.dot_dimension_numbers<[1], [0], [0], [1], [0, 0, 1, 1], [], []>} : vector<8x8xf32>, vector<8x256xf32>, vector<8x256xf32> -> vector<8x256xf32>
    %56 = arith.addf %42, %55 : vector<8x256xf32>
    %c1_i32_37 = arith.constant 1 : i32
    %57 = tpu.dynamic_rotate %7 by %c1_i32_37 dim 1 : vector<8x256xf32>, i32 -> vector<8x256xf32>
    %c1_i32_38 = arith.constant 1 : i32
    %58 = vector.broadcast %c1_i32_38 : i32 to vector<1x256xi32>
    %59 = arith.cmpi sge, %16, %58 : vector<1x256xi32>
    %cst_39 = arith.constant 0.000000e+00 : f32
    %60 = vector.shape_cast %59 : vector<1x256xi1> to vector<1x256xi1>
    %61 = vector.broadcast %60 : vector<1x256xi1> to vector<8x256xi1>
    %62 = vector.broadcast %cst_39 : f32 to vector<8x256xf32>
    %63 = arith.select %61, %57, %62 : vector<8x256xi1>, vector<8x256xf32>
    %c1_40 = arith.constant 1 : index
    %c0_41 = arith.constant 0 : index
    %c0_42 = arith.constant 0 : index
    %c0_43 = arith.constant 0 : index
    %64 = vector.load %arg7[%c1_40, %c0_41, %c0_42, %c0_43] : memref<3x3x8x8xf32, #tpu.memory_space<vmem>>, vector<1x1x8x8xf32>
    %65 = vector.shape_cast %64 : vector<1x1x8x8xf32> to vector<8x8xf32>
    %cst_44 = arith.constant dense<0.000000e+00> : vector<8x256xf32>
    %66 = tpu.matmul %65, %63, %cst_44 {dimension_numbers = #tpu.dot_dimension_numbers<[1], [0], [0], [1], [0, 0, 1, 1], [], []>} : vector<8x8xf32>, vector<8x256xf32>, vector<8x256xf32> -> vector<8x256xf32>
    %67 = arith.addf %56, %66 : vector<8x256xf32>
    %c1_45 = arith.constant 1 : index
    %c1_46 = arith.constant 1 : index
    %c0_47 = arith.constant 0 : index
    %c0_48 = arith.constant 0 : index
    %68 = vector.load %arg7[%c1_45, %c1_46, %c0_47, %c0_48] : memref<3x3x8x8xf32, #tpu.memory_space<vmem>>, vector<1x1x8x8xf32>
    %69 = vector.shape_cast %68 : vector<1x1x8x8xf32> to vector<8x8xf32>
    %cst_49 = arith.constant dense<0.000000e+00> : vector<8x256xf32>
    %70 = tpu.matmul %69, %7, %cst_49 {dimension_numbers = #tpu.dot_dimension_numbers<[1], [0], [0], [1], [0, 0, 1, 1], [], []>} : vector<8x8xf32>, vector<8x256xf32>, vector<8x256xf32> -> vector<8x256xf32>
    %71 = arith.addf %67, %70 : vector<8x256xf32>
    %c255_i32 = arith.constant 255 : i32
    %72 = tpu.dynamic_rotate %7 by %c255_i32 dim 1 : vector<8x256xf32>, i32 -> vector<8x256xf32>
    %c15_i32_50 = arith.constant 15 : i32
    %73 = vector.broadcast %c15_i32_50 : i32 to vector<1x256xi32>
    %74 = arith.cmpi slt, %16, %73 : vector<1x256xi32>
    %cst_51 = arith.constant 0.000000e+00 : f32
    %75 = vector.shape_cast %74 : vector<1x256xi1> to vector<1x256xi1>
    %76 = vector.broadcast %75 : vector<1x256xi1> to vector<8x256xi1>
    %77 = vector.broadcast %cst_51 : f32 to vector<8x256xf32>
    %78 = arith.select %76, %72, %77 : vector<8x256xi1>, vector<8x256xf32>
    %c1_52 = arith.constant 1 : index
    %c2_53 = arith.constant 2 : index
    %c0_54 = arith.constant 0 : index
    %c0_55 = arith.constant 0 : index
    %79 = vector.load %arg7[%c1_52, %c2_53, %c0_54, %c0_55] : memref<3x3x8x8xf32, #tpu.memory_space<vmem>>, vector<1x1x8x8xf32>
    %80 = vector.shape_cast %79 : vector<1x1x8x8xf32> to vector<8x8xf32>
    %cst_56 = arith.constant dense<0.000000e+00> : vector<8x256xf32>
    %81 = tpu.matmul %80, %78, %cst_56 {dimension_numbers = #tpu.dot_dimension_numbers<[1], [0], [0], [1], [0, 0, 1, 1], [], []>} : vector<8x8xf32>, vector<8x256xf32>, vector<8x256xf32> -> vector<8x256xf32>
    %82 = arith.addf %71, %81 : vector<8x256xf32>
    %c241_i32 = arith.constant 241 : i32
    %83 = tpu.dynamic_rotate %7 by %c241_i32 dim 1 : vector<8x256xf32>, i32 -> vector<8x256xf32>
    %c15_i32_57 = arith.constant 15 : i32
    %84 = vector.broadcast %c15_i32_57 : i32 to vector<1x256xi32>
    %85 = arith.cmpi slt, %15, %84 : vector<1x256xi32>
    %c1_i32_58 = arith.constant 1 : i32
    %86 = vector.broadcast %c1_i32_58 : i32 to vector<1x256xi32>
    %87 = arith.cmpi sge, %16, %86 : vector<1x256xi32>
    %88 = arith.andi %85, %87 : vector<1x256xi1>
    %cst_59 = arith.constant 0.000000e+00 : f32
    %89 = vector.shape_cast %88 : vector<1x256xi1> to vector<1x256xi1>
    %90 = vector.broadcast %89 : vector<1x256xi1> to vector<8x256xi1>
    %91 = vector.broadcast %cst_59 : f32 to vector<8x256xf32>
    %92 = arith.select %90, %83, %91 : vector<8x256xi1>, vector<8x256xf32>
    %c2_60 = arith.constant 2 : index
    %c0_61 = arith.constant 0 : index
    %c0_62 = arith.constant 0 : index
    %c0_63 = arith.constant 0 : index
    %93 = vector.load %arg7[%c2_60, %c0_61, %c0_62, %c0_63] : memref<3x3x8x8xf32, #tpu.memory_space<vmem>>, vector<1x1x8x8xf32>
    %94 = vector.shape_cast %93 : vector<1x1x8x8xf32> to vector<8x8xf32>
    %cst_64 = arith.constant dense<0.000000e+00> : vector<8x256xf32>
    %95 = tpu.matmul %94, %92, %cst_64 {dimension_numbers = #tpu.dot_dimension_numbers<[1], [0], [0], [1], [0, 0, 1, 1], [], []>} : vector<8x8xf32>, vector<8x256xf32>, vector<8x256xf32> -> vector<8x256xf32>
    %96 = arith.addf %82, %95 : vector<8x256xf32>
    %c240_i32 = arith.constant 240 : i32
    %97 = tpu.dynamic_rotate %7 by %c240_i32 dim 1 : vector<8x256xf32>, i32 -> vector<8x256xf32>
    %c15_i32_65 = arith.constant 15 : i32
    %98 = vector.broadcast %c15_i32_65 : i32 to vector<1x256xi32>
    %99 = arith.cmpi slt, %15, %98 : vector<1x256xi32>
    %cst_66 = arith.constant 0.000000e+00 : f32
    %100 = vector.shape_cast %99 : vector<1x256xi1> to vector<1x256xi1>
    %101 = vector.broadcast %100 : vector<1x256xi1> to vector<8x256xi1>
    %102 = vector.broadcast %cst_66 : f32 to vector<8x256xf32>
    %103 = arith.select %101, %97, %102 : vector<8x256xi1>, vector<8x256xf32>
    %c2_67 = arith.constant 2 : index
    %c1_68 = arith.constant 1 : index
    %c0_69 = arith.constant 0 : index
    %c0_70 = arith.constant 0 : index
    %104 = vector.load %arg7[%c2_67, %c1_68, %c0_69, %c0_70] : memref<3x3x8x8xf32, #tpu.memory_space<vmem>>, vector<1x1x8x8xf32>
    %105 = vector.shape_cast %104 : vector<1x1x8x8xf32> to vector<8x8xf32>
    %cst_71 = arith.constant dense<0.000000e+00> : vector<8x256xf32>
    %106 = tpu.matmul %105, %103, %cst_71 {dimension_numbers = #tpu.dot_dimension_numbers<[1], [0], [0], [1], [0, 0, 1, 1], [], []>} : vector<8x8xf32>, vector<8x256xf32>, vector<8x256xf32> -> vector<8x256xf32>
    %107 = arith.addf %96, %106 : vector<8x256xf32>
    %c239_i32 = arith.constant 239 : i32
    %108 = tpu.dynamic_rotate %7 by %c239_i32 dim 1 : vector<8x256xf32>, i32 -> vector<8x256xf32>
    %c15_i32_72 = arith.constant 15 : i32
    %109 = vector.broadcast %c15_i32_72 : i32 to vector<1x256xi32>
    %110 = arith.cmpi slt, %15, %109 : vector<1x256xi32>
    %c15_i32_73 = arith.constant 15 : i32
    %111 = vector.broadcast %c15_i32_73 : i32 to vector<1x256xi32>
    %112 = arith.cmpi slt, %16, %111 : vector<1x256xi32>
    %113 = arith.andi %110, %112 : vector<1x256xi1>
    %cst_74 = arith.constant 0.000000e+00 : f32
    %114 = vector.shape_cast %113 : vector<1x256xi1> to vector<1x256xi1>
    %115 = vector.broadcast %114 : vector<1x256xi1> to vector<8x256xi1>
    %116 = vector.broadcast %cst_74 : f32 to vector<8x256xf32>
    %117 = arith.select %115, %108, %116 : vector<8x256xi1>, vector<8x256xf32>
    %c2_75 = arith.constant 2 : index
    %c2_76 = arith.constant 2 : index
    %c0_77 = arith.constant 0 : index
    %c0_78 = arith.constant 0 : index
    %118 = vector.load %arg7[%c2_75, %c2_76, %c0_77, %c0_78] : memref<3x3x8x8xf32, #tpu.memory_space<vmem>>, vector<1x1x8x8xf32>
    %119 = vector.shape_cast %118 : vector<1x1x8x8xf32> to vector<8x8xf32>
    %cst_79 = arith.constant dense<0.000000e+00> : vector<8x256xf32>
    %120 = tpu.matmul %119, %117, %cst_79 {dimension_numbers = #tpu.dot_dimension_numbers<[1], [0], [0], [1], [0, 0, 1, 1], [], []>} : vector<8x8xf32>, vector<8x256xf32>, vector<8x256xf32> -> vector<8x256xf32>
    %121 = arith.addf %107, %120 : vector<8x256xf32>
    %c0_80 = arith.constant 0 : index
    %c0_81 = arith.constant 0 : index
    %122 = vector.load %arg8[%c0_80, %c0_81] : memref<8x1xf32, #tpu.memory_space<vmem>>, vector<8x1xf32>
    %123 = vector.broadcast %122 : vector<8x1xf32> to vector<8x256xf32>
    %124 = arith.addf %121, %123 : vector<8x256xf32>
    %cst_82 = arith.constant 0.000000e+00 : f32
    %125 = vector.broadcast %cst_82 : f32 to vector<8x256xf32>
    %126 = arith.maximumf %124, %125 : vector<8x256xf32>
    %c0_83 = arith.constant 0 : index
    %c0_84 = arith.constant 0 : index
    %127 = vector.load %arg9[%c0_83, %c0_84] : memref<16x256xf32, #tpu.memory_space<vmem>>, vector<8x256xf32>
    tpu.vector_store %arg9[%c0_83, %c0_84], %14 {strides = array<i32>} : memref<16x256xf32, #tpu.memory_space<vmem>>, vector<8x256xf32>,
    %c8 = arith.constant 8 : index
    %c0_85 = arith.constant 0 : index
    %128 = vector.load %arg9[%c8, %c0_85] : memref<16x256xf32, #tpu.memory_space<vmem>>, vector<8x256xf32>
    tpu.vector_store %arg9[%c8, %c0_85], %126 {strides = array<i32>} : memref<16x256xf32, #tpu.memory_space<vmem>>, vector<8x256xf32>,
    return
  }
  func.func @transform_0(%arg0: i32) -> (i32, i32) {
    %c0_i32 = arith.constant 0 : i32
    %c0_i32_0 = arith.constant 0 : i32
    return %c0_i32, %arg0 : i32, i32
  }
  func.func @transform_1(%arg0: i32) -> (i32, i32) {
    %c0_i32 = arith.constant 0 : i32
    %c0_i32_0 = arith.constant 0 : i32
    return %c0_i32, %arg0 : i32, i32
  }
  func.func @transform_2(%arg0: i32) -> (i32, i32) {
    %c0_i32 = arith.constant 0 : i32
    %c0_i32_0 = arith.constant 0 : i32
    %c0_i32_1 = arith.constant 0 : i32
    return %c0_i32, %c0_i32_0 : i32, i32
  }
  func.func @transform_3(%arg0: i32) -> (i32, i32) {
    %c0_i32 = arith.constant 0 : i32
    %c0_i32_0 = arith.constant 0 : i32
    %c0_i32_1 = arith.constant 0 : i32
    return %c0_i32, %c0_i32_0 : i32, i32
  }
  func.func @transform_4(%arg0: i32) -> (i32, i32) {
    %c0_i32 = arith.constant 0 : i32
    %c0_i32_0 = arith.constant 0 : i32
    %c0_i32_1 = arith.constant 0 : i32
    return %c0_i32, %c0_i32_0 : i32, i32
  }
  func.func @transform_5(%arg0: i32) -> (i32, i32) {
    %c0_i32 = arith.constant 0 : i32
    %c0_i32_0 = arith.constant 0 : i32
    %c0_i32_1 = arith.constant 0 : i32
    return %c0_i32, %c0_i32_0 : i32, i32
  }
  func.func @transform_6(%arg0: i32) -> (i32, i32, i32, i32) {
    %c0_i32 = arith.constant 0 : i32
    %c0_i32_0 = arith.constant 0 : i32
    %c0_i32_1 = arith.constant 0 : i32
    %c0_i32_2 = arith.constant 0 : i32
    %c0_i32_3 = arith.constant 0 : i32
    return %c0_i32, %c0_i32_0, %c0_i32_1, %c0_i32_2 : i32, i32, i32, i32
  }
  func.func @transform_7(%arg0: i32) -> (i32, i32) {
    %c0_i32 = arith.constant 0 : i32
    %c0_i32_0 = arith.constant 0 : i32
    %c0_i32_1 = arith.constant 0 : i32
    return %c0_i32, %c0_i32_0 : i32, i32
  }
  func.func @transform_8(%arg0: i32) -> (i32, i32) {
    %c0_i32 = arith.constant 0 : i32
    %c0_i32_0 = arith.constant 0 : i32
    return %c0_i32, %arg0 : i32, i32
  }
}

</mosaic_0001>

<llo_original>
// kernel: tpu_custom_call.1
$region0: #{tpu_custom_call.1}
  #allocation0 [shape = 'u32[]', space=smem, size = 0x4, offset = 0x4, fixed_abs, tag = 'smem constant byte address 0x4 - core index']
  #allocation1 [shape = 'u32[144,128]{1,0:T(1,128)}', space=vmem, size = 0x12000, scoped, tag = 'internal scratch']
  %s0 = inlined_call_operand.vmem [shape: f32[4,512], index: 0, kind: input, shape index: {}]
  %s1 = inlined_call_operand.vmem [shape: s32[2,512], index: 1, kind: input, shape index: {}]
  %s2 = inlined_call_operand.vmem [shape: f32[8,4], index: 2, kind: input, shape index: {}]
  %s3 = inlined_call_operand.vmem [shape: f32[8,1], index: 3, kind: input, shape index: {}]
  %s4 = inlined_call_operand.vmem [shape: f32[8,8], index: 4, kind: input, shape index: {}]
  %s5 = inlined_call_operand.vmem [shape: f32[8,1], index: 5, kind: input, shape index: {}]
  %s6 = inlined_call_operand.hbm [shape: f32[3,3,8,8], index: 6, kind: input, shape index: {}]
  %s7 = inlined_call_operand.vmem [shape: f32[8,1], index: 7, kind: input, shape index: {}]
  %s8 = inlined_call_operand.hbm [shape: f32[16,512], index: 8, kind: output, shape index: {}]
  %s9 = sld [smem:[#allocation0]]
  $region69: #{tpu_custom_call.1} parent=0
    _
  %s11 = ssub.s32 1, %s9
  %s12 = scalar_select 0, %s11, %s9
  $region1: #{tpu_custom_call.1} parent=0
    #allocation2 [shape = 'u8[36864]{0}', space=vmem, size = 0x9000, scoped, tag = 'input window, operand 6, single buffered']
    #allocation3 [shape = 's32[2]{0}', space=sflag, size = 0x8, scoped, tag = 'scoped memory for tpu_custom_call.1']
    #allocation4 [shape = 's32[2]{0}', space=sflag, size = 0x8, scoped, tag = 'scoped memory for tpu_custom_call.1']
    #allocation5 [shape = 'u8[32768]{0}', space=vmem, size = 0x8000, scoped, tag = 'output window, operand 0']
    %13 = vsyncpa [#allocation3], 0
    %14 = vsyncpa [#allocation4], 0
    %s15 = scalar_lea.sflag [#allocation4], 1
    %16 = vsyncpa %s15, 0
    loop: start=0, step=1, limit=4
    $region2: #{tpu_custom_call.1} parent=1 // loop_pre_header
      _
    $region3: #{tpu_custom_call.1} parent=1 // loop_header
      %s18 = sphi 0, %s22
      %p19 = scmp.ge.s32.totalorder %s18, 4
      %s28 = sphi 0, %s30
      %s31 = sphi 0, %s28
      %s32 = sphi 0, %s31
      %s48 = sphi 0, %s32
      %s54 = sphi 0, %s56
      %s57 = sphi 0, %s54
      %s58 = sphi 0, %s57
      %s74 = sphi 0, %s58
      %s78 = sphi 0, %s78
      %s80 = sphi 0, %s78
      %s81 = sphi 0, %s80
      %s95 = sphi 0, %s81
      %s99 = sphi 0, %s99
      %s101 = sphi 0, %s99
      %s102 = sphi 0, %s101
      %s116 = sphi 0, %s102
      %s120 = sphi 0, %s120
      %s122 = sphi 0, %s120
      %s123 = sphi 0, %s122
      %s137 = sphi 0, %s123
      %s141 = sphi 0, %s141
      %s143 = sphi 0, %s141
      %s144 = sphi 0, %s143
      %s158 = sphi 0, %s144
      %s162 = sphi 0, %s162
      %s164 = sphi 0, %s162
      %s165 = sphi 0, %s164
      %s179 = sphi 0, %s165
      %s183 = sphi 0, %s183
      %s185 = sphi 0, %s183
      %s186 = sphi 0, %s185
      %s200 = sphi 0, %s186
      %s206 = sphi 0, %s208
      %s209 = sphi 0, %s206
      %s210 = sphi 0, %s209
      %s226 = sphi 0, %s210
    $region4: #{tpu_custom_call.1} parent=1 // loop_header_branch
      %21 = sbr.rel (%p19) target = $region8
    $region5: #{tpu_custom_call.1} parent=1 // loop_body
      %s23 = ssub.s32 %s18, 1
      %s24 = ssub.s32 %s18, 2
      %s25 = sadd.s32 %s18, 1
      %s26 = ssub.s32 %s18, %s25
      %p27 = scmp.eq.s32.totalorder %s26, 0
      %s29 = sadd.s32 %s28, 1
      %s30 = scalar_select %p27, %s28, %s29
      %p33 = pneg %p27
      %p34 = scmp.eq.s32.totalorder %s18, 1
      %p35 = por %p33, %p34
      %p36 = scmp.ne.s32.totalorder %s28, %s31
      %p37 = scmp.eq.s32.totalorder %s18, 0
      %p38 = por %p36, %p37
      %p39 = scmp.ne.s32.totalorder %s28, %s31
      %p40 = scmp.eq.s32.totalorder %s23, 1
      %p41 = por %p39, %p40
      %p42 = scmp.ne.s32.totalorder %s31, %s32
      %p43 = scmp.eq.s32.totalorder %s23, 0
      %p44 = por %p42, %p43
      %p45 = scmp.ne.s32.totalorder %s31, %s32
      %p46 = scmp.eq.s32.totalorder %s24, 1
      %p47 = por %p45, %p46
      %p49 = scmp.ne.s32.totalorder %s32, %s48
      %p50 = scmp.eq.s32.totalorder %s24, 0
      %p51 = por %p49, %p50
      %s52 = ssub.s32 %s18, %s25
      %p53 = scmp.eq.s32.totalorder %s52, 0
      %s55 = sadd.s32 %s54, 1
      %s56 = scalar_select %p53, %s54, %s55
      %p59 = pneg %p53
      %p60 = scmp.eq.s32.totalorder %s18, 1
      %p61 = por %p59, %p60
      %p62 = scmp.ne.s32.totalorder %s54, %s57
      %p63 = scmp.eq.s32.totalorder %s18, 0
      %p64 = por %p62, %p63
      %p65 = scmp.ne.s32.totalorder %s54, %s57
      %p66 = scmp.eq.s32.totalorder %s23, 1
      %p67 = por %p65, %p66
      %p68 = scmp.ne.s32.totalorder %s57, %s58
      %p69 = scmp.eq.s32.totalorder %s23, 0
      %p70 = por %p68, %p69
      %p71 = scmp.ne.s32.totalorder %s57, %s58
      %p72 = scmp.eq.s32.totalorder %s24, 1
      %p73 = por %p71, %p72
      %p75 = scmp.ne.s32.totalorder %s58, %s74
      %p76 = scmp.eq.s32.totalorder %s24, 0
      %p77 = por %p75, %p76
      %s79 = sadd.s32 %s78, 1
      %p82 = scmp.eq.s32.totalorder %s18, 1
      %p83 = scmp.ne.s32.totalorder %s78, %s80
      %p84 = scmp.eq.s32.totalorder %s18, 0
      %p85 = por %p83, %p84
      %p86 = scmp.ne.s32.totalorder %s78, %s80
      %p87 = scmp.eq.s32.totalorder %s23, 1
      %p88 = por %p86, %p87
      %p89 = scmp.ne.s32.totalorder %s80, %s81
      %p90 = scmp.eq.s32.totalorder %s23, 0
      %p91 = por %p89, %p90
      %p92 = scmp.ne.s32.totalorder %s80, %s81
      %p93 = scmp.eq.s32.totalorder %s24, 1
      %p94 = por %p92, %p93
      %p96 = scmp.ne.s32.totalorder %s81, %s95
      %p97 = scmp.eq.s32.totalorder %s24, 0
      %p98 = por %p96, %p97
      %s100 = sadd.s32 %s99, 1
      %p103 = scmp.eq.s32.totalorder %s18, 1
      %p104 = scmp.ne.s32.totalorder %s99, %s101
      %p105 = scmp.eq.s32.totalorder %s18, 0
      %p106 = por %p104, %p105
      %p107 = scmp.ne.s32.totalorder %s99, %s101
      %p108 = scmp.eq.s32.totalorder %s23, 1
      %p109 = por %p107, %p108
      %p110 = scmp.ne.s32.totalorder %s101, %s102
      %p111 = scmp.eq.s32.totalorder %s23, 0
      %p112 = por %p110, %p111
      %p113 = scmp.ne.s32.totalorder %s101, %s102
      %p114 = scmp.eq.s32.totalorder %s24, 1
      %p115 = por %p113, %p114
      %p117 = scmp.ne.s32.totalorder %s102, %s116
      %p118 = scmp.eq.s32.totalorder %s24, 0
      %p119 = por %p117, %p118
      %s121 = sadd.s32 %s120, 1
      %p124 = scmp.eq.s32.totalorder %s18, 1
      %p125 = scmp.ne.s32.totalorder %s120, %s122
      %p126 = scmp.eq.s32.totalorder %s18, 0
      %p127 = por %p125, %p126
      %p128 = scmp.ne.s32.totalorder %s120, %s122
      %p129 = scmp.eq.s32.totalorder %s23, 1
      %p130 = por %p128, %p129
      %p131 = scmp.ne.s32.totalorder %s122, %s123
      %p132 = scmp.eq.s32.totalorder %s23, 0
      %p133 = por %p131, %p132
      %p134 = scmp.ne.s32.totalorder %s122, %s123
      %p135 = scmp.eq.s32.totalorder %s24, 1
      %p136 = por %p134, %p135
      %p138 = scmp.ne.s32.totalorder %s123, %s137
      %p139 = scmp.eq.s32.totalorder %s24, 0
      %p140 = por %p138, %p139
      %s142 = sadd.s32 %s141, 1
      %p145 = scmp.eq.s32.totalorder %s18, 1
      %p146 = scmp.ne.s32.totalorder %s141, %s143
      %p147 = scmp.eq.s32.totalorder %s18, 0
      %p148 = por %p146, %p147
      %p149 = scmp.ne.s32.totalorder %s141, %s143
      %p150 = scmp.eq.s32.totalorder %s23, 1
      %p151 = por %p149, %p150
      %p152 = scmp.ne.s32.totalorder %s143, %s144
      %p153 = scmp.eq.s32.totalorder %s23, 0
      %p154 = por %p152, %p153
      %p155 = scmp.ne.s32.totalorder %s143, %s144
      %p156 = scmp.eq.s32.totalorder %s24, 1
      %p157 = por %p155, %p156
      %p159 = scmp.ne.s32.totalorder %s144, %s158
      %p160 = scmp.eq.s32.totalorder %s24, 0
      %p161 = por %p159, %p160
      %s163 = sadd.s32 %s162, 1
      %p166 = scmp.eq.s32.totalorder %s18, 1
      %p167 = scmp.ne.s32.totalorder %s162, %s164
      %p168 = scmp.eq.s32.totalorder %s18, 0
      %p169 = por %p167, %p168
      %p170 = scmp.ne.s32.totalorder %s162, %s164
      %p171 = scmp.eq.s32.totalorder %s23, 1
      %p172 = por %p170, %p171
      %p173 = scmp.ne.s32.totalorder %s164, %s165
      %p174 = scmp.eq.s32.totalorder %s23, 0
      %p175 = por %p173, %p174
      %p176 = scmp.ne.s32.totalorder %s164, %s165
      %p177 = scmp.eq.s32.totalorder %s24, 1
      %p178 = por %p176, %p177
      %p180 = scmp.ne.s32.totalorder %s165, %s179
      %p181 = scmp.eq.s32.totalorder %s24, 0
      %p182 = por %p180, %p181
      %s184 = sadd.s32 %s183, 1
      %p187 = scmp.eq.s32.totalorder %s18, 1
      %p188 = scmp.ne.s32.totalorder %s183, %s185
      %p189 = scmp.eq.s32.totalorder %s18, 0
      %p190 = por %p188, %p189
      %p191 = scmp.ne.s32.totalorder %s183, %s185
      %p192 = scmp.eq.s32.totalorder %s23, 1
      %p193 = por %p191, %p192
      %p194 = scmp.ne.s32.totalorder %s185, %s186
      %p195 = scmp.eq.s32.totalorder %s23, 0
      %p196 = por %p194, %p195
      %p197 = scmp.ne.s32.totalorder %s185, %s186
      %p198 = scmp.eq.s32.totalorder %s24, 1
      %p199 = por %p197, %p198
      %p201 = scmp.ne.s32.totalorder %s186, %s200
      %p202 = scmp.eq.s32.totalorder %s24, 0
      %p203 = por %p201, %p202
      %s204 = ssub.s32 %s18, %s25
      %p205 = scmp.eq.s32.totalorder %s204, 0
      %s207 = sadd.s32 %s206, 1
      %s208 = scalar_select %p205, %s206, %s207
      %p211 = pneg %p205
      %p212 = scmp.eq.s32.totalorder %s18, 1
      %p213 = por %p211, %p212
      %p214 = scmp.ne.s32.totalorder %s206, %s209
      %p215 = scmp.eq.s32.totalorder %s18, 0
      %p216 = por %p214, %p215
      %p217 = scmp.ne.s32.totalorder %s206, %s209
      %p218 = scmp.eq.s32.totalorder %s23, 1
      %p219 = por %p217, %p218
      %p220 = scmp.ne.s32.totalorder %s209, %s210
      %p221 = scmp.eq.s32.totalorder %s23, 0
      %p222 = por %p220, %p221
      %p223 = scmp.ne.s32.totalorder %s209, %s210
      %p224 = scmp.eq.s32.totalorder %s24, 1
      %p225 = por %p223, %p224
      %p227 = scmp.ne.s32.totalorder %s210, %s226
      %p228 = scmp.eq.s32.totalorder %s24, 0
      %p229 = por %p227, %p228
      %p230 = scmp.le.s32.totalorder 1, %s18
      %p231 = scmp.lt.s32.totalorder %s18, 3
      %p232 = pnand %p230, %p231
      %p233 = pneg %p232
      // Predicated region
      $region9: #{tpu_custom_call.1} parent=5 // pred_check
        _
      $region10: #{tpu_custom_call.1} parent=5 // pred_check_branch
        %235 = sbr.rel (%p232) target = $region12
      $region11: #{tpu_custom_call.1} parent=5 // pred_region
        %s236 = ssub.s32 %s18, 1
        // Predicated region
        $region13: #{tpu_custom_call.1} parent=11 // pred_check
          %p237 = pneg %p91
        $region14: #{tpu_custom_call.1} parent=11 // pred_check_branch
          %239 = sbr.rel (%p237) target = $region16
        $region15: #{tpu_custom_call.1} parent=11 // pred_region
          _
        $region16: #{tpu_custom_call.1} parent=11 // pred_fallthru
          _
        // Predicated region
        $region17: #{tpu_custom_call.1} parent=11 // pred_check
          %p240 = pneg %p112
        $region18: #{tpu_custom_call.1} parent=11 // pred_check_branch
          %242 = sbr.rel (%p240) target = $region20
        $region19: #{tpu_custom_call.1} parent=11 // pred_region
          _
        $region20: #{tpu_custom_call.1} parent=11 // pred_fallthru
          _
        // Predicated region
        $region21: #{tpu_custom_call.1} parent=11 // pred_check
          %p243 = pneg %p133
        $region22: #{tpu_custom_call.1} parent=11 // pred_check_branch
          %245 = sbr.rel (%p243) target = $region24
        $region23: #{tpu_custom_call.1} parent=11 // pred_region
          _
        $region24: #{tpu_custom_call.1} parent=11 // pred_fallthru
          _
        // Predicated region
        $region25: #{tpu_custom_call.1} parent=11 // pred_check
          %p246 = pneg %p154
        $region26: #{tpu_custom_call.1} parent=11 // pred_check_branch
          %248 = sbr.rel (%p246) target = $region28
        $region27: #{tpu_custom_call.1} parent=11 // pred_region
          _
        $region28: #{tpu_custom_call.1} parent=11 // pred_fallthru
          _
        // Predicated region
        $region29: #{tpu_custom_call.1} parent=11 // pred_check
          %p249 = pneg %p175
        $region30: #{tpu_custom_call.1} parent=11 // pred_check_branch
          %251 = sbr.rel (%p249) target = $region32
        $region31: #{tpu_custom_call.1} parent=11 // pred_region
          %s253 = ssub.s32 1152, 1152
          %254 = vsyncadd [#allocation3], %s253
          %s255 = sshll.u32 [#allocation2], 4
          %s256 = int_to_ptr.vmem [resolvable:$true] %s255
          %261 = dma.hbm_to_vmem [thread:$0]  %s6, 1152, %s256, [#allocation3], 128, 128, 8
        $region32: #{tpu_custom_call.1} parent=11 // pred_fallthru
          _
        // Predicated region
        $region33: #{tpu_custom_call.1} parent=11 // pred_check
          %p262 = pneg %p196
        $region34: #{tpu_custom_call.1} parent=11 // pred_check_branch
          %264 = sbr.rel (%p262) target = $region36
        $region35: #{tpu_custom_call.1} parent=11 // pred_region
          _
        $region36: #{tpu_custom_call.1} parent=11 // pred_fallthru
          _
      $region12: #{tpu_custom_call.1} parent=5 // pred_fallthru
        _
      %p265 = scmp.lt.s32.totalorder %s18, 2
      // Predicated region
      $region37: #{tpu_custom_call.1} parent=5 // pred_check
        %p266 = pneg %p265
      $region38: #{tpu_custom_call.1} parent=5 // pred_check_branch
        %268 = sbr.rel (%p266) target = $region40
      $region39: #{tpu_custom_call.1} parent=5 // pred_region
        // Predicated region
        $region41: #{tpu_custom_call.1} parent=39 // pred_check
          %p269 = pneg %p38
        $region42: #{tpu_custom_call.1} parent=39 // pred_check_branch
          %271 = sbr.rel (%p269) target = $region44
        $region43: #{tpu_custom_call.1} parent=39 // pred_region
          %s272 = smul.u32 2, %s18
          %p273 = scmp.lt.s32.totalorder %s272, 3
          %s274 = scalar_select %p273, %s272, 3
          %s275 = smul.addr %s274, 4
          %s276 = scalar_lea.vmem %s0, %s275
          %s277 = smul.u32 2, %s18
        $region44: #{tpu_custom_call.1} parent=39 // pred_fallthru
          _
        // Predicated region
        $region45: #{tpu_custom_call.1} parent=39 // pred_check
          %p278 = pneg %p64
        $region46: #{tpu_custom_call.1} parent=39 // pred_check_branch
          %280 = sbr.rel (%p278) target = $region48
        $region47: #{tpu_custom_call.1} parent=39 // pred_region
          %s281 = smul.u32 2, %s18
          %p282 = scmp.lt.s32.totalorder %s281, 3
          %s283 = scalar_select %p282, %s281, 3
          %s284 = smul.addr %s283, 2
          %s285 = scalar_lea.vmem %s1, %s284
          %s286 = smul.u32 2, %s18
        $region48: #{tpu_custom_call.1} parent=39 // pred_fallthru
          _
      $region40: #{tpu_custom_call.1} parent=5 // pred_fallthru
        _
      %p287 = scmp.le.s32.totalorder 1, %s18
      %p288 = scmp.lt.s32.totalorder %s18, 3
      %p289 = pnand %p287, %p288
      %p290 = pneg %p289
      // Predicated region
      $region49: #{tpu_custom_call.1} parent=5 // pred_check
        _
      $region50: #{tpu_custom_call.1} parent=5 // pred_check_branch
        %292 = sbr.rel (%p289) target = $region52
      $region51: #{tpu_custom_call.1} parent=5 // pred_region
        %s293 = ssub.s32 %s18, 1
        // Predicated region
        $region53: #{tpu_custom_call.1} parent=51 // pred_check
          %p294 = pneg %p175
        $region54: #{tpu_custom_call.1} parent=51 // pred_check_branch
          %296 = sbr.rel (%p294) target = $region56
        $region55: #{tpu_custom_call.1} parent=51 // pred_region
          %297 = dma.done [#allocation3], 1152
        $region56: #{tpu_custom_call.1} parent=51 // pred_fallthru
          _
        %s298 = smul.u32 2, %s23
        %p299 = scmp.lt.s32.totalorder %s298, 3
        %s300 = scalar_select %p299, %s298, 3
        %s301 = smul.addr %s300, 4
        %s302 = scalar_lea.vmem %s0, %s301
        %p303 = pneg %p44
        %p304 = pneg %p41
        %s305 = smul.u32 2, %s23
        %p306 = scmp.lt.s32.totalorder %s305, 3
        %s307 = scalar_select %p306, %s305, 3
        %s308 = smul.addr %s307, 2
        %s309 = scalar_lea.vmem %s1, %s308
        %p310 = pneg %p70
        %p311 = pneg %p67
        %p312 = pneg %p91
        %p313 = pneg %p88
        %p314 = pneg %p112
        %p315 = pneg %p109
        %p316 = pneg %p133
        %p317 = pneg %p130
        %p318 = pneg %p154
        %p319 = pneg %p151
        %p320 = pneg %p175
        %p321 = pneg %p172
        %p322 = pneg %p196
        %p323 = pneg %p193
        %p324 = pneg %p222
        %p325 = pneg %p219
        %s326 = sand.u32 %s209, 1
        %s327 = scalar_lea.sflag [#allocation4], %s326
        %s328 = sand.u32 %s209, 1
        %s329 = smul.addr %s328, 32
        %s330 = scalar_lea.vmem [#allocation5], %s329
        %s331 = smul.u32 2, %s23
        %p332 = scmp.lt.s32.totalorder %s331, 3
        %s333 = scalar_select %p332, %s331, 3
        %s334 = smul.addr %s333, 4
        %s335 = scalar_lea.vmem %s0, %s334
        %s336 = smul.u32 2, %s23
        %s337 = smul.u32 2, %s23
        %p338 = scmp.lt.s32.totalorder %s337, 3
        %s339 = scalar_select %p338, %s337, 3
        %s340 = smul.addr %s339, 2
        %s341 = scalar_lea.vmem %s1, %s340
        %s342 = smul.u32 2, %s23
        %s343 = smul.u32 2, %s23
        %v344 = vld [vmem:[%s335] sm:$0xff]
        %v345 = vld [vmem:[%s2] sm:$0xff]
        %v346 = vld [vmem:[%s3] sm:$0xff]
        %348 = vset.pattern.permute.xlu0 0
        %349 = vperm.xlu0 %348, %v346
        %v350 = vpop.permute.xlu0 %349
        %v353 = vcombine.high %v344, %v344
        %vm354 = vcmask 31744
        %v356 = vsel %vm354, %v345, 0
        %vm358 = vcmask 1043456
        %v359 = vsel %vm358, %v344, 0
        %v361 = vsel %vm358, %v353, 0
        %363 = vmatprep.subr.mxu0 %v361
        %364 = vmatpush1.msra.mxu0 %v359
        %365 = vmatprep.subr.mxu0 0.0
        %366 = vmatpush1.msra.mxu0 0.0
        %367 = vmatprep.subr.mxu0 0.0
        %368 = vmatpush1.msra.mxu0 0.0
        %369 = vmatprep.subr.mxu0 0.0
        %370 = vmatpush1.msra.mxu0 0.0
        %371 = vmatprep.subr.mxu0 0.0
        %372 = vmatpush1.msra.mxu0 0.0
        %373 = vmatprep.subr.mxu0 0.0
        %374 = vmatpush1.msra.mxu0 0.0
        %375 = vmatprep.subr.mxu0 0.0
        %376 = vmatpush1.msra.mxu0 0.0
        %377 = vmatprep.subr.mxu0 0.0
        %378 = vmatpush1.msra.mxu0 0.0
        %379 = vmatprep.subr.mxu0 0.0
        %380 = vmatpush1.msra.mxu0 0.0
        %381 = vmatprep.subr.mxu0 0.0
        %382 = vmatpush1.msra.mxu0 0.0
        %383 = vmatprep.subr.mxu0 0.0
        %384 = vmatpush1.msra.mxu0 0.0
        %385 = vmatprep.subr.mxu0 0.0
        %386 = vmatpush1.msra.mxu0 0.0
        %387 = vmatprep.subr.mxu0 0.0
        %388 = vmatpush1.msra.mxu0 0.0
        %389 = vmatprep.subr.mxu0 0.0
        %390 = vmatpush1.msra.mxu0 0.0
        %391 = vmatprep.subr.mxu0 0.0
        %392 = vmatpush1.msra.mxu0 0.0
        %393 = vmatprep.subr.mxu0 0.0
        %394 = vmatpush1.msra.mxu0 0.0
        %395 = vmatprep.subr.mxu0 0.0
        %396 = vmatpush1.msra.mxu0 0.0
        %397 = vmatprep.subr.mxu0 0.0
        %398 = vmatpush1.msra.mxu0 0.0
        %399 = vmatprep.subr.mxu0 0.0
        %400 = vmatpush1.msra.mxu0 0.0
        %401 = vmatprep.subr.mxu0 0.0
        %402 = vmatpush1.msra.mxu0 0.0
        %403 = vmatprep.subr.mxu0 0.0
        %404 = vmatpush1.msra.mxu0 0.0
        %405 = vmatprep.subr.mxu0 0.0
        %406 = vmatpush1.msra.mxu0 0.0
        %407 = vmatprep.subr.mxu0 0.0
        %408 = vmatpush1.msra.mxu0 0.0
        %409 = vmatprep.subr.mxu0 0.0
        %410 = vmatpush1.msra.mxu0 0.0
        %411 = vmatprep.subr.mxu0 0.0
        %412 = vmatpush1.msra.mxu0 0.0
        %413 = vmatprep.subr.mxu0 0.0
        %414 = vmatpush1.msra.mxu0 0.0
        %415 = vmatprep.subr.mxu0 0.0
        %416 = vmatpush1.msra.mxu0 0.0
        %417 = vmatprep.subr.mxu0 0.0
        %418 = vmatpush1.msra.mxu0 0.0
        %419 = vmatprep.subr.mxu0 0.0
        %420 = vmatpush1.msra.mxu0 0.0
        %421 = vmatprep.subr.mxu0 0.0
        %422 = vmatpush1.msra.mxu0 0.0
        %423 = vmatprep.subr.mxu0 0.0
        %424 = vmatpush1.msra.mxu0 0.0
        %425 = vmatprep.subr.mxu0 0.0
        %426 = vmatpush1.msra.mxu0 0.0
        %427 = vmatprep.mubr.f32.mxu0 0.0
        %428 = vmatmul.mubr.f32.gmra.mrb[0].mxu0 %v356
        %v429 = vpop.f32.mrb[0].mxu0
        %v430 = vadd.f32 %v350, %v429
        %v431 = vpop.f32.mrb[0].mxu0
        %v432 = vadd.f32 %v350, %v431
        %433 = vdwg.mxu0
        %v434 = vmax.f32 %v430, 0.0
        %v435 = vmax.f32 %v432, 0.0
        %v436 = vld [vmem:[%s4] sm:$0xff]
        %v437 = vld [vmem:[%s5] sm:$0xff]
        %439 = vset.pattern.permute.xlu0 0
        %440 = vperm.xlu0 %439, %v437
        %v441 = vpop.permute.xlu0 %440
        %vm443 = vcmask 64512
        %v445 = vsel %vm443, %v436, 0
        %447 = vmatprep.subr.mxu0 %v435
        %448 = vmatpush1.msra.mxu0 %v434
        %449 = vmatprep.subr.mxu0 0.0
        %450 = vmatpush1.msra.mxu0 0.0
        %451 = vmatprep.subr.mxu0 0.0
        %452 = vmatpush1.msra.mxu0 0.0
        %453 = vmatprep.subr.mxu0 0.0
        %454 = vmatpush1.msra.mxu0 0.0
        %455 = vmatprep.subr.mxu0 0.0
        %456 = vmatpush1.msra.mxu0 0.0
        %457 = vmatprep.subr.mxu0 0.0
        %458 = vmatpush1.msra.mxu0 0.0
        %459 = vmatprep.subr.mxu0 0.0
        %460 = vmatpush1.msra.mxu0 0.0
        %461 = vmatprep.subr.mxu0 0.0
        %462 = vmatpush1.msra.mxu0 0.0
        %463 = vmatprep.subr.mxu0 0.0
        %464 = vmatpush1.msra.mxu0 0.0
        %465 = vmatprep.subr.mxu0 0.0
        %466 = vmatpush1.msra.mxu0 0.0
        %467 = vmatprep.subr.mxu0 0.0
        %468 = vmatpush1.msra.mxu0 0.0
        %469 = vmatprep.subr.mxu0 0.0
        %470 = vmatpush1.msra.mxu0 0.0
        %471 = vmatprep.subr.mxu0 0.0
        %472 = vmatpush1.msra.mxu0 0.0
        %473 = vmatprep.subr.mxu0 0.0
        %474 = vmatpush1.msra.mxu0 0.0
        %475 = vmatprep.subr.mxu0 0.0
        %476 = vmatpush1.msra.mxu0 0.0
        %477 = vmatprep.subr.mxu0 0.0
        %478 = vmatpush1.msra.mxu0 0.0
        %479 = vmatprep.subr.mxu0 0.0
        %480 = vmatpush1.msra.mxu0 0.0
        %481 = vmatprep.subr.mxu0 0.0
        %482 = vmatpush1.msra.mxu0 0.0
        %483 = vmatprep.subr.mxu0 0.0
        %484 = vmatpush1.msra.mxu0 0.0
        %485 = vmatprep.subr.mxu0 0.0
        %486 = vmatpush1.msra.mxu0 0.0
        %487 = vmatprep.subr.mxu0 0.0
        %488 = vmatpush1.msra.mxu0 0.0
        %489 = vmatprep.subr.mxu0 0.0
        %490 = vmatpush1.msra.mxu0 0.0
        %491 = vmatprep.subr.mxu0 0.0
        %492 = vmatpush1.msra.mxu0 0.0
        %493 = vmatprep.subr.mxu0 0.0
        %494 = vmatpush1.msra.mxu0 0.0
        %495 = vmatprep.subr.mxu0 0.0
        %496 = vmatpush1.msra.mxu0 0.0
        %497 = vmatprep.subr.mxu0 0.0
        %498 = vmatpush1.msra.mxu0 0.0
        %499 = vmatprep.subr.mxu0 0.0
        %500 = vmatpush1.msra.mxu0 0.0
        %501 = vmatprep.subr.mxu0 0.0
        %502 = vmatpush1.msra.mxu0 0.0
        %503 = vmatprep.subr.mxu0 0.0
        %504 = vmatpush1.msra.mxu0 0.0
        %505 = vmatprep.subr.mxu0 0.0
        %506 = vmatpush1.msra.mxu0 0.0
        %507 = vmatprep.subr.mxu0 0.0
        %508 = vmatpush1.msra.mxu0 0.0
        %509 = vmatprep.subr.mxu0 0.0
        %510 = vmatpush1.msra.mxu0 0.0
        %511 = vmatprep.mubr.f32.mxu0 0.0
        %512 = vmatmul.mubr.f32.gmra.mrb[0].mxu0 %v445
        %v513 = vpop.f32.mrb[0].mxu0
        %v514 = vadd.f32 %v441, %v513
        %v515 = vpop.f32.mrb[0].mxu0
        %v516 = vadd.f32 %v441, %v515
        %517 = vdwg.mxu0
        %v518 = vmax.f32 %v514, 0.0
        %v519 = vmax.f32 %v516, 0.0
        %v520 = vld [vmem:[%s341] ss:$2 sm:$0x3]
        %s521 = scalar_lea.vmem %s341, 1
        %v522 = vld [vmem:[%s521] ss:$2 sm:$0x3]
        %523 = vrot.lane.b32.xlu0 %v434, 17
        %v524 = vpop.permute.xlu0 %523
        %525 = vrot.lane.b32.xlu0 %v435, 17
        %v526 = vpop.permute.xlu0 %525
        %v527 = vlaneseq
        %v528 = vand.u32 %v527, 127
        %vm529 = vcmp.lt.s32.totalorder %v528, 17
        %v530 = vsel %vm529, %v524, %v526
        %v531 = vsel %vm529, %v526, %v524
        %vm532 = vcmp.ge.s32.totalorder %v520, 1
        %vm533 = vcmp.ge.s32.totalorder %v522, 1
        %vm534 = vmand %vm532, %vm533
        %v535 = vsel %vm534, 1, 0
        %v536 = vlaneseq
        %v537 = vshrl.u32 %v536, 7
        %v538 = vsub.s32 0, %v537
        %v539 = vrot.slane %v535, %v538
        %v540 = vlaneseq
        %v541 = vshrl.u32 %v540, 7
        %v542 = vsub.s32 1, %v541
        %v543 = vrot.slane %v535, %v542
        %vm544 = vcmp.eq.s32.totalorder %v539, 1
        %vm545 = vcmp.eq.s32.totalorder %v543, 1
        %v546 = vsel %vm544, %v531, 0.0
        %v547 = vsel %vm545, %v530, 0.0
        %v548 = vld [vmem:[#allocation2] sm:$0xff]
        %549 = vrot.lane.b32.xlu0 %v434, 16
        %v550 = vpop.permute.xlu0 %549
        %551 = vrot.lane.b32.xlu0 %v435, 16
        %v552 = vpop.permute.xlu0 %551
        %vm553 = vcmp.lt.s32.totalorder %v528, 16
        %v554 = vsel %vm553, %v550, %v552
        %v555 = vsel %vm553, %v552, %v550
        %v556 = vsel %vm532, 1, 0
        %v557 = vlaneseq
        %v558 = vshrl.u32 %v557, 7
        %v559 = vsub.s32 0, %v558
        %v560 = vrot.slane %v556, %v559
        %v561 = vlaneseq
        %v562 = vshrl.u32 %v561, 7
        %v563 = vsub.s32 1, %v562
        %v564 = vrot.slane %v556, %v563
        %vm565 = vcmp.eq.s32.totalorder %v560, 1
        %vm566 = vcmp.eq.s32.totalorder %v564, 1
        %v567 = vsel %vm565, %v555, 0.0
        %v568 = vsel %vm566, %v554, 0.0
        %s569 = scalar_lea.vmem [#allocation2], 8
        %v570 = vld [vmem:[%s569] sm:$0xff]
        %v572 = vsel %vm443, %v570, 0
        %574 = vmatprep.subr.mxu0 %v568
        %575 = vmatpush1.msra.mxu0 %v567
        %576 = vmatprep.subr.mxu0 0.0
        %577 = vmatpush1.msra.mxu0 0.0
        %578 = vmatprep.subr.mxu0 0.0
        %579 = vmatpush1.msra.mxu0 0.0
        %580 = vmatprep.subr.mxu0 0.0
        %581 = vmatpush1.msra.mxu0 0.0
        %582 = vmatprep.subr.mxu0 0.0
        %583 = vmatpush1.msra.mxu0 0.0
        %584 = vmatprep.subr.mxu0 0.0
        %585 = vmatpush1.msra.mxu0 0.0
        %586 = vmatprep.subr.mxu0 0.0
        %587 = vmatpush1.msra.mxu0 0.0
        %588 = vmatprep.subr.mxu0 0.0
        %589 = vmatpush1.msra.mxu0 0.0
        %590 = vmatprep.subr.mxu0 0.0
        %591 = vmatpush1.msra.mxu0 0.0
        %592 = vmatprep.subr.mxu0 0.0
        %593 = vmatpush1.msra.mxu0 0.0
        %594 = vmatprep.subr.mxu0 0.0
        %595 = vmatpush1.msra.mxu0 0.0
        %596 = vmatprep.subr.mxu0 0.0
        %597 = vmatpush1.msra.mxu0 0.0
        %598 = vmatprep.subr.mxu0 0.0
        %599 = vmatpush1.msra.mxu0 0.0
        %600 = vmatprep.subr.mxu0 0.0
        %601 = vmatpush1.msra.mxu0 0.0
        %602 = vmatprep.subr.mxu0 0.0
        %603 = vmatpush1.msra.mxu0 0.0
        %604 = vmatprep.subr.mxu0 0.0
        %605 = vmatpush1.msra.mxu0 0.0
        %606 = vmatprep.subr.mxu0 0.0
        %607 = vmatpush1.msra.mxu0 0.0
        %608 = vmatprep.subr.mxu0 0.0
        %609 = vmatpush1.msra.mxu0 0.0
        %610 = vmatprep.subr.mxu0 0.0
        %611 = vmatpush1.msra.mxu0 0.0
        %612 = vmatprep.subr.mxu0 0.0
        %613 = vmatpush1.msra.mxu0 0.0
        %614 = vmatprep.subr.mxu0 0.0
        %615 = vmatpush1.msra.mxu0 0.0
        %616 = vmatprep.subr.mxu0 0.0
        %617 = vmatpush1.msra.mxu0 0.0
        %618 = vmatprep.subr.mxu0 0.0
        %619 = vmatpush1.msra.mxu0 0.0
        %620 = vmatprep.subr.mxu0 0.0
        %621 = vmatpush1.msra.mxu0 0.0
        %622 = vmatprep.subr.mxu0 0.0
        %623 = vmatpush1.msra.mxu0 0.0
        %624 = vmatprep.subr.mxu0 0.0
        %625 = vmatpush1.msra.mxu0 0.0
        %626 = vmatprep.subr.mxu0 0.0
        %627 = vmatpush1.msra.mxu0 0.0
        %628 = vmatprep.subr.mxu0 0.0
        %629 = vmatpush1.msra.mxu0 0.0
        %630 = vmatprep.subr.mxu0 0.0
        %631 = vmatpush1.msra.mxu0 0.0
        %632 = vmatprep.subr.mxu0 0.0
        %633 = vmatpush1.msra.mxu0 0.0
        %634 = vmatprep.subr.mxu0 0.0
        %635 = vmatpush1.msra.mxu0 0.0
        %636 = vmatprep.subr.mxu0 0.0
        %637 = vmatpush1.msra.mxu0 0.0
        %638 = vmatprep.mubr.f32.mxu0 0.0
        %639 = vmatmul.mubr.f32.gmra.mrb[0].mxu0 %v572
        %v640 = vpop.f32.mrb[0].mxu0
        %v641 = vadd.f32 0.0, %v640
        %v642 = vpop.f32.mrb[0].mxu0
        %v643 = vadd.f32 0.0, %v642
        %644 = vdwg.mxu0
        %v646 = vsel %vm443, %v548, 0
        %648 = vmatprep.subr.mxu0 %v547
        %649 = vmatpush1.msra.mxu0 %v546
        %650 = vmatprep.subr.mxu0 0.0
        %651 = vmatpush1.msra.mxu0 0.0
        %652 = vmatprep.subr.mxu0 0.0
        %653 = vmatpush1.msra.mxu0 0.0
        %654 = vmatprep.subr.mxu0 0.0
        %655 = vmatpush1.msra.mxu0 0.0
        %656 = vmatprep.subr.mxu0 0.0
        %657 = vmatpush1.msra.mxu0 0.0
        %658 = vmatprep.subr.mxu0 0.0
        %659 = vmatpush1.msra.mxu0 0.0
        %660 = vmatprep.subr.mxu0 0.0
        %661 = vmatpush1.msra.mxu0 0.0
        %662 = vmatprep.subr.mxu0 0.0
        %663 = vmatpush1.msra.mxu0 0.0
        %664 = vmatprep.subr.mxu0 0.0
        %665 = vmatpush1.msra.mxu0 0.0
        %666 = vmatprep.subr.mxu0 0.0
        %667 = vmatpush1.msra.mxu0 0.0
        %668 = vmatprep.subr.mxu0 0.0
        %669 = vmatpush1.msra.mxu0 0.0
        %670 = vmatprep.subr.mxu0 0.0
        %671 = vmatpush1.msra.mxu0 0.0
        %672 = vmatprep.subr.mxu0 0.0
        %673 = vmatpush1.msra.mxu0 0.0
        %674 = vmatprep.subr.mxu0 0.0
        %675 = vmatpush1.msra.mxu0 0.0
        %676 = vmatprep.subr.mxu0 0.0
        %677 = vmatpush1.msra.mxu0 0.0
        %678 = vmatprep.subr.mxu0 0.0
        %679 = vmatpush1.msra.mxu0 0.0
        %680 = vmatprep.subr.mxu0 0.0
        %681 = vmatpush1.msra.mxu0 0.0
        %682 = vmatprep.subr.mxu0 0.0
        %683 = vmatpush1.msra.mxu0 0.0
        %684 = vmatprep.subr.mxu0 0.0
        %685 = vmatpush1.msra.mxu0 0.0
        %686 = vmatprep.subr.mxu0 0.0
        %687 = vmatpush1.msra.mxu0 0.0
        %688 = vmatprep.subr.mxu0 0.0
        %689 = vmatpush1.msra.mxu0 0.0
        %690 = vmatprep.subr.mxu0 0.0
        %691 = vmatpush1.msra.mxu0 0.0
        %692 = vmatprep.subr.mxu0 0.0
        %693 = vmatpush1.msra.mxu0 0.0
        %694 = vmatprep.subr.mxu0 0.0
        %695 = vmatpush1.msra.mxu0 0.0
        %696 = vmatprep.subr.mxu0 0.0
        %697 = vmatpush1.msra.mxu0 0.0
        %698 = vmatprep.subr.mxu0 0.0
        %699 = vmatpush1.msra.mxu0 0.0
        %700 = vmatprep.subr.mxu0 0.0
        %701 = vmatpush1.msra.mxu0 0.0
        %702 = vmatprep.subr.mxu0 0.0
        %703 = vmatpush1.msra.mxu0 0.0
        %704 = vmatprep.subr.mxu0 0.0
        %705 = vmatpush1.msra.mxu0 0.0
        %706 = vmatprep.subr.mxu0 0.0
        %707 = vmatpush1.msra.mxu0 0.0
        %708 = vmatprep.subr.mxu0 0.0
        %709 = vmatpush1.msra.mxu0 0.0
        %710 = vmatprep.subr.mxu0 0.0
        %711 = vmatpush1.msra.mxu0 0.0
        %712 = vmatprep.mubr.f32.mxu0 0.0
        %713 = vmatmul.mubr.f32.gmra.mrb[0].mxu0 %v646
        %v714 = vpop.f32.mrb[0].mxu0
        %v715 = vadd.f32 %v641, %v714
        %v716 = vpop.f32.mrb[0].mxu0
        %v717 = vadd.f32 %v643, %v716
        %718 = vdwg.mxu0
        %719 = vrot.lane.b32.xlu0 %v434, 15
        %v720 = vpop.permute.xlu0 %719
        %721 = vrot.lane.b32.xlu0 %v435, 15
        %v722 = vpop.permute.xlu0 %721
        %vm723 = vcmp.lt.s32.totalorder %v528, 15
        %v724 = vsel %vm723, %v720, %v722
        %v725 = vsel %vm723, %v722, %v720
        %vm726 = vcmp.lt.s32.totalorder %v522, 15
        %vm727 = vmand %vm532, %vm726
        %v728 = vsel %vm727, 1, 0
        %v729 = vlaneseq
        %v730 = vshrl.u32 %v729, 7
        %v731 = vsub.s32 0, %v730
        %v732 = vrot.slane %v728, %v731
        %v733 = vlaneseq
        %v734 = vshrl.u32 %v733, 7
        %v735 = vsub.s32 1, %v734
        %v736 = vrot.slane %v728, %v735
        %vm737 = vcmp.eq.s32.totalorder %v732, 1
        %vm738 = vcmp.eq.s32.totalorder %v736, 1
        %v739 = vsel %vm737, %v725, 0.0
        %v740 = vsel %vm738, %v724, 0.0
        %s741 = scalar_lea.vmem [#allocation2], 16
        %v742 = vld [vmem:[%s741] sm:$0xff]
        %v744 = vsel %vm443, %v742, 0
        %746 = vmatprep.subr.mxu0 %v740
        %747 = vmatpush1.msra.mxu0 %v739
        %748 = vmatprep.subr.mxu0 0.0
        %749 = vmatpush1.msra.mxu0 0.0
        %750 = vmatprep.subr.mxu0 0.0
        %751 = vmatpush1.msra.mxu0 0.0
        %752 = vmatprep.subr.mxu0 0.0
        %753 = vmatpush1.msra.mxu0 0.0
        %754 = vmatprep.subr.mxu0 0.0
        %755 = vmatpush1.msra.mxu0 0.0
        %756 = vmatprep.subr.mxu0 0.0
        %757 = vmatpush1.msra.mxu0 0.0
        %758 = vmatprep.subr.mxu0 0.0
        %759 = vmatpush1.msra.mxu0 0.0
        %760 = vmatprep.subr.mxu0 0.0
        %761 = vmatpush1.msra.mxu0 0.0
        %762 = vmatprep.subr.mxu0 0.0
        %763 = vmatpush1.msra.mxu0 0.0
        %764 = vmatprep.subr.mxu0 0.0
        %765 = vmatpush1.msra.mxu0 0.0
        %766 = vmatprep.subr.mxu0 0.0
        %767 = vmatpush1.msra.mxu0 0.0
        %768 = vmatprep.subr.mxu0 0.0
        %769 = vmatpush1.msra.mxu0 0.0
        %770 = vmatprep.subr.mxu0 0.0
        %771 = vmatpush1.msra.mxu0 0.0
        %772 = vmatprep.subr.mxu0 0.0
        %773 = vmatpush1.msra.mxu0 0.0
        %774 = vmatprep.subr.mxu0 0.0
        %775 = vmatpush1.msra.mxu0 0.0
        %776 = vmatprep.subr.mxu0 0.0
        %777 = vmatpush1.msra.mxu0 0.0
        %778 = vmatprep.subr.mxu0 0.0
        %779 = vmatpush1.msra.mxu0 0.0
        %780 = vmatprep.subr.mxu0 0.0
        %781 = vmatpush1.msra.mxu0 0.0
        %782 = vmatprep.subr.mxu0 0.0
        %783 = vmatpush1.msra.mxu0 0.0
        %784 = vmatprep.subr.mxu0 0.0
        %785 = vmatpush1.msra.mxu0 0.0
        %786 = vmatprep.subr.mxu0 0.0
        %787 = vmatpush1.msra.mxu0 0.0
        %788 = vmatprep.subr.mxu0 0.0
        %789 = vmatpush1.msra.mxu0 0.0
        %790 = vmatprep.subr.mxu0 0.0
        %791 = vmatpush1.msra.mxu0 0.0
        %792 = vmatprep.subr.mxu0 0.0
        %793 = vmatpush1.msra.mxu0 0.0
        %794 = vmatprep.subr.mxu0 0.0
        %795 = vmatpush1.msra.mxu0 0.0
        %796 = vmatprep.subr.mxu0 0.0
        %797 = vmatpush1.msra.mxu0 0.0
        %798 = vmatprep.subr.mxu0 0.0
        %799 = vmatpush1.msra.mxu0 0.0
        %800 = vmatprep.subr.mxu0 0.0
        %801 = vmatpush1.msra.mxu0 0.0
        %802 = vmatprep.subr.mxu0 0.0
        %803 = vmatpush1.msra.mxu0 0.0
        %804 = vmatprep.subr.mxu0 0.0
        %805 = vmatpush1.msra.mxu0 0.0
        %806 = vmatprep.subr.mxu0 0.0
        %807 = vmatpush1.msra.mxu0 0.0
        %808 = vmatprep.subr.mxu0 0.0
        %809 = vmatpush1.msra.mxu0 0.0
        %810 = vmatprep.mubr.f32.mxu0 0.0
        %811 = vmatmul.mubr.f32.gmra.mrb[0].mxu0 %v744
        %v812 = vpop.f32.mrb[0].mxu0
        %v813 = vadd.f32 0.0, %v812
        %v814 = vpop.f32.mrb[0].mxu0
        %v815 = vadd.f32 0.0, %v814
        %816 = vdwg.mxu0
        %v817 = vadd.f32 %v715, %v813
        %v818 = vadd.f32 %v717, %v815
        %819 = vrot.lane.b32.xlu0 %v434, 1
        %v820 = vpop.permute.xlu0 %819
        %821 = vrot.lane.b32.xlu0 %v435, 1
        %v822 = vpop.permute.xlu0 %821
        %vm823 = vcmp.lt.s32.totalorder %v528, 1
        %v824 = vsel %vm823, %v820, %v822
        %v825 = vsel %vm823, %v822, %v820
        %v826 = vsel %vm533, 1, 0
        %v827 = vlaneseq
        %v828 = vshrl.u32 %v827, 7
        %v829 = vsub.s32 0, %v828
        %v830 = vrot.slane %v826, %v829
        %v831 = vlaneseq
        %v832 = vshrl.u32 %v831, 7
        %v833 = vsub.s32 1, %v832
        %v834 = vrot.slane %v826, %v833
        %vm835 = vcmp.eq.s32.totalorder %v830, 1
        %vm836 = vcmp.eq.s32.totalorder %v834, 1
        %v837 = vsel %vm835, %v825, 0.0
        %v838 = vsel %vm836, %v824, 0.0
        %s839 = scalar_lea.vmem [#allocation2], 24
        %v840 = vld [vmem:[%s839] sm:$0xff]
        %v842 = vsel %vm443, %v840, 0
        %844 = vmatprep.subr.mxu0 %v838
        %845 = vmatpush1.msra.mxu0 %v837
        %846 = vmatprep.subr.mxu0 0.0
        %847 = vmatpush1.msra.mxu0 0.0
        %848 = vmatprep.subr.mxu0 0.0
        %849 = vmatpush1.msra.mxu0 0.0
        %850 = vmatprep.subr.mxu0 0.0
        %851 = vmatpush1.msra.mxu0 0.0
        %852 = vmatprep.subr.mxu0 0.0
        %853 = vmatpush1.msra.mxu0 0.0
        %854 = vmatprep.subr.mxu0 0.0
        %855 = vmatpush1.msra.mxu0 0.0
        %856 = vmatprep.subr.mxu0 0.0
        %857 = vmatpush1.msra.mxu0 0.0
        %858 = vmatprep.subr.mxu0 0.0
        %859 = vmatpush1.msra.mxu0 0.0
        %860 = vmatprep.subr.mxu0 0.0
        %861 = vmatpush1.msra.mxu0 0.0
        %862 = vmatprep.subr.mxu0 0.0
        %863 = vmatpush1.msra.mxu0 0.0
        %864 = vmatprep.subr.mxu0 0.0
        %865 = vmatpush1.msra.mxu0 0.0
        %866 = vmatprep.subr.mxu0 0.0
        %867 = vmatpush1.msra.mxu0 0.0
        %868 = vmatprep.subr.mxu0 0.0
        %869 = vmatpush1.msra.mxu0 0.0
        %870 = vmatprep.subr.mxu0 0.0
        %871 = vmatpush1.msra.mxu0 0.0
        %872 = vmatprep.subr.mxu0 0.0
        %873 = vmatpush1.msra.mxu0 0.0
        %874 = vmatprep.subr.mxu0 0.0
        %875 = vmatpush1.msra.mxu0 0.0
        %876 = vmatprep.subr.mxu0 0.0
        %877 = vmatpush1.msra.mxu0 0.0
        %878 = vmatprep.subr.mxu0 0.0
        %879 = vmatpush1.msra.mxu0 0.0
        %880 = vmatprep.subr.mxu0 0.0
        %881 = vmatpush1.msra.mxu0 0.0
        %882 = vmatprep.subr.mxu0 0.0
        %883 = vmatpush1.msra.mxu0 0.0
        %884 = vmatprep.subr.mxu0 0.0
        %885 = vmatpush1.msra.mxu0 0.0
        %886 = vmatprep.subr.mxu0 0.0
        %887 = vmatpush1.msra.mxu0 0.0
        %888 = vmatprep.subr.mxu0 0.0
        %889 = vmatpush1.msra.mxu0 0.0
        %890 = vmatprep.subr.mxu0 0.0
        %891 = vmatpush1.msra.mxu0 0.0
        %892 = vmatprep.subr.mxu0 0.0
        %893 = vmatpush1.msra.mxu0 0.0
        %894 = vmatprep.subr.mxu0 0.0
        %895 = vmatpush1.msra.mxu0 0.0
        %896 = vmatprep.subr.mxu0 0.0
        %897 = vmatpush1.msra.mxu0 0.0
        %898 = vmatprep.subr.mxu0 0.0
        %899 = vmatpush1.msra.mxu0 0.0
        %900 = vmatprep.subr.mxu0 0.0
        %901 = vmatpush1.msra.mxu0 0.0
        %902 = vmatprep.subr.mxu0 0.0
        %903 = vmatpush1.msra.mxu0 0.0
        %904 = vmatprep.subr.mxu0 0.0
        %905 = vmatpush1.msra.mxu0 0.0
        %906 = vmatprep.subr.mxu0 0.0
        %907 = vmatpush1.msra.mxu0 0.0
        %908 = vmatprep.mubr.f32.mxu0 0.0
        %909 = vmatmul.mubr.f32.gmra.mrb[0].mxu0 %v842
        %v910 = vpop.f32.mrb[0].mxu0
        %v911 = vadd.f32 0.0, %v910
        %v912 = vpop.f32.mrb[0].mxu0
        %v913 = vadd.f32 0.0, %v912
        %914 = vdwg.mxu0
        %v915 = vadd.f32 %v817, %v911
        %v916 = vadd.f32 %v818, %v913
        %s917 = scalar_lea.vmem [#allocation2], 32
        %v918 = vld [vmem:[%s917] sm:$0xff]
        %v920 = vsel %vm443, %v918, 0
        %922 = vmatprep.subr.mxu0 %v435
        %923 = vmatpush1.msra.mxu0 %v434
        %924 = vmatprep.subr.mxu0 0.0
        %925 = vmatpush1.msra.mxu0 0.0
        %926 = vmatprep.subr.mxu0 0.0
        %927 = vmatpush1.msra.mxu0 0.0
        %928 = vmatprep.subr.mxu0 0.0
        %929 = vmatpush1.msra.mxu0 0.0
        %930 = vmatprep.subr.mxu0 0.0
        %931 = vmatpush1.msra.mxu0 0.0
        %932 = vmatprep.subr.mxu0 0.0
        %933 = vmatpush1.msra.mxu0 0.0
        %934 = vmatprep.subr.mxu0 0.0
        %935 = vmatpush1.msra.mxu0 0.0
        %936 = vmatprep.subr.mxu0 0.0
        %937 = vmatpush1.msra.mxu0 0.0
        %938 = vmatprep.subr.mxu0 0.0
        %939 = vmatpush1.msra.mxu0 0.0
        %940 = vmatprep.subr.mxu0 0.0
        %941 = vmatpush1.msra.mxu0 0.0
        %942 = vmatprep.subr.mxu0 0.0
        %943 = vmatpush1.msra.mxu0 0.0
        %944 = vmatprep.subr.mxu0 0.0
        %945 = vmatpush1.msra.mxu0 0.0
        %946 = vmatprep.subr.mxu0 0.0
        %947 = vmatpush1.msra.mxu0 0.0
        %948 = vmatprep.subr.mxu0 0.0
        %949 = vmatpush1.msra.mxu0 0.0
        %950 = vmatprep.subr.mxu0 0.0
        %951 = vmatpush1.msra.mxu0 0.0
        %952 = vmatprep.subr.mxu0 0.0
        %953 = vmatpush1.msra.mxu0 0.0
        %954 = vmatprep.subr.mxu0 0.0
        %955 = vmatpush1.msra.mxu0 0.0
        %956 = vmatprep.subr.mxu0 0.0
        %957 = vmatpush1.msra.mxu0 0.0
        %958 = vmatprep.subr.mxu0 0.0
        %959 = vmatpush1.msra.mxu0 0.0
        %960 = vmatprep.subr.mxu0 0.0
        %961 = vmatpush1.msra.mxu0 0.0
        %962 = vmatprep.subr.mxu0 0.0
        %963 = vmatpush1.msra.mxu0 0.0
        %964 = vmatprep.subr.mxu0 0.0
        %965 = vmatpush1.msra.mxu0 0.0
        %966 = vmatprep.subr.mxu0 0.0
        %967 = vmatpush1.msra.mxu0 0.0
        %968 = vmatprep.subr.mxu0 0.0
        %969 = vmatpush1.msra.mxu0 0.0
        %970 = vmatprep.subr.mxu0 0.0
        %971 = vmatpush1.msra.mxu0 0.0
        %972 = vmatprep.subr.mxu0 0.0
        %973 = vmatpush1.msra.mxu0 0.0
        %974 = vmatprep.subr.mxu0 0.0
        %975 = vmatpush1.msra.mxu0 0.0
        %976 = vmatprep.subr.mxu0 0.0
        %977 = vmatpush1.msra.mxu0 0.0
        %978 = vmatprep.subr.mxu0 0.0
        %979 = vmatpush1.msra.mxu0 0.0
        %980 = vmatprep.subr.mxu0 0.0
        %981 = vmatpush1.msra.mxu0 0.0
        %982 = vmatprep.subr.mxu0 0.0
        %983 = vmatpush1.msra.mxu0 0.0
        %984 = vmatprep.subr.mxu0 0.0
        %985 = vmatpush1.msra.mxu0 0.0
        %986 = vmatprep.mubr.f32.mxu0 0.0
        %987 = vmatmul.mubr.f32.gmra.mrb[0].mxu0 %v920
        %v988 = vpop.f32.mrb[0].mxu0
        %v989 = vadd.f32 0.0, %v988
        %v990 = vpop.f32.mrb[0].mxu0
        %v991 = vadd.f32 0.0, %v990
        %992 = vdwg.mxu0
        %v993 = vadd.f32 %v915, %v989
        %v994 = vadd.f32 %v916, %v991
        %995 = vrot.lane.b32.xlu0 %v434, 127
        %v996 = vpop.permute.xlu0 %995
        %997 = vrot.lane.b32.xlu0 %v435, 127
        %v998 = vpop.permute.xlu0 %997
        %vm999 = vcmp.lt.s32.totalorder %v528, 127
        %v1000 = vsel %vm999, %v996, %v998
        %v1001 = vsel %vm999, %v998, %v996
        %v1002 = vsel %vm726, 1, 0
        %v1003 = vlaneseq
        %v1004 = vshrl.u32 %v1003, 7
        %v1005 = vsub.s32 0, %v1004
        %v1006 = vrot.slane %v1002, %v1005
        %v1007 = vlaneseq
        %v1008 = vshrl.u32 %v1007, 7
        %v1009 = vsub.s32 1, %v1008
        %v1010 = vrot.slane %v1002, %v1009
        %vm1011 = vcmp.eq.s32.totalorder %v1006, 1
        %vm1012 = vcmp.eq.s32.totalorder %v1010, 1
        %v1013 = vsel %vm1011, %v1000, 0.0
        %v1014 = vsel %vm1012, %v1001, 0.0
        %s1015 = scalar_lea.vmem [#allocation2], 40
        %v1016 = vld [vmem:[%s1015] sm:$0xff]
        %v1018 = vsel %vm443, %v1016, 0
        %1020 = vmatprep.subr.mxu0 %v1014
        %1021 = vmatpush1.msra.mxu0 %v1013
        %1022 = vmatprep.subr.mxu0 0.0
        %1023 = vmatpush1.msra.mxu0 0.0
        %1024 = vmatprep.subr.mxu0 0.0
        %1025 = vmatpush1.msra.mxu0 0.0
        %1026 = vmatprep.subr.mxu0 0.0
        %1027 = vmatpush1.msra.mxu0 0.0
        %1028 = vmatprep.subr.mxu0 0.0
        %1029 = vmatpush1.msra.mxu0 0.0
        %1030 = vmatprep.subr.mxu0 0.0
        %1031 = vmatpush1.msra.mxu0 0.0
        %1032 = vmatprep.subr.mxu0 0.0
        %1033 = vmatpush1.msra.mxu0 0.0
        %1034 = vmatprep.subr.mxu0 0.0
        %1035 = vmatpush1.msra.mxu0 0.0
        %1036 = vmatprep.subr.mxu0 0.0
        %1037 = vmatpush1.msra.mxu0 0.0
        %1038 = vmatprep.subr.mxu0 0.0
        %1039 = vmatpush1.msra.mxu0 0.0
        %1040 = vmatprep.subr.mxu0 0.0
        %1041 = vmatpush1.msra.mxu0 0.0
        %1042 = vmatprep.subr.mxu0 0.0
        %1043 = vmatpush1.msra.mxu0 0.0
        %1044 = vmatprep.subr.mxu0 0.0
        %1045 = vmatpush1.msra.mxu0 0.0
        %1046 = vmatprep.subr.mxu0 0.0
        %1047 = vmatpush1.msra.mxu0 0.0
        %1048 = vmatprep.subr.mxu0 0.0
        %1049 = vmatpush1.msra.mxu0 0.0
        %1050 = vmatprep.subr.mxu0 0.0
        %1051 = vmatpush1.msra.mxu0 0.0
        %1052 = vmatprep.subr.mxu0 0.0
        %1053 = vmatpush1.msra.mxu0 0.0
        %1054 = vmatprep.subr.mxu0 0.0
        %1055 = vmatpush1.msra.mxu0 0.0
        %1056 = vmatprep.subr.mxu0 0.0
        %1057 = vmatpush1.msra.mxu0 0.0
        %1058 = vmatprep.subr.mxu0 0.0
        %1059 = vmatpush1.msra.mxu0 0.0
        %1060 = vmatprep.subr.mxu0 0.0
        %1061 = vmatpush1.msra.mxu0 0.0
        %1062 = vmatprep.subr.mxu0 0.0
        %1063 = vmatpush1.msra.mxu0 0.0
        %1064 = vmatprep.subr.mxu0 0.0
        %1065 = vmatpush1.msra.mxu0 0.0
        %1066 = vmatprep.subr.mxu0 0.0
        %1067 = vmatpush1.msra.mxu0 0.0
        %1068 = vmatprep.subr.mxu0 0.0
        %1069 = vmatpush1.msra.mxu0 0.0
        %1070 = vmatprep.subr.mxu0 0.0
        %1071 = vmatpush1.msra.mxu0 0.0
        %1072 = vmatprep.subr.mxu0 0.0
        %1073 = vmatpush1.msra.mxu0 0.0
        %1074 = vmatprep.subr.mxu0 0.0
        %1075 = vmatpush1.msra.mxu0 0.0
        %1076 = vmatprep.subr.mxu0 0.0
        %1077 = vmatpush1.msra.mxu0 0.0
        %1078 = vmatprep.subr.mxu0 0.0
        %1079 = vmatpush1.msra.mxu0 0.0
        %1080 = vmatprep.subr.mxu0 0.0
        %1081 = vmatpush1.msra.mxu0 0.0
        %1082 = vmatprep.subr.mxu0 0.0
        %1083 = vmatpush1.msra.mxu0 0.0
        %1084 = vmatprep.mubr.f32.mxu0 0.0
        %1085 = vmatmul.mubr.f32.gmra.mrb[0].mxu0 %v1018
        %v1086 = vpop.f32.mrb[0].mxu0
        %v1087 = vadd.f32 0.0, %v1086
        %v1088 = vpop.f32.mrb[0].mxu0
        %v1089 = vadd.f32 0.0, %v1088
        %1090 = vdwg.mxu0
        %v1091 = vadd.f32 %v993, %v1087
        %v1092 = vadd.f32 %v994, %v1089
        %1093 = vrot.lane.b32.xlu0 %v434, 113
        %v1094 = vpop.permute.xlu0 %1093
        %1095 = vrot.lane.b32.xlu0 %v435, 113
        %v1096 = vpop.permute.xlu0 %1095
        %vm1097 = vcmp.lt.s32.totalorder %v528, 113
        %v1098 = vsel %vm1097, %v1094, %v1096
        %v1099 = vsel %vm1097, %v1096, %v1094
        %vm1100 = vcmp.lt.s32.totalorder %v520, 15
        %vm1101 = vmand %vm1100, %vm533
        %v1102 = vsel %vm1101, 1, 0
        %v1103 = vlaneseq
        %v1104 = vshrl.u32 %v1103, 7
        %v1105 = vsub.s32 0, %v1104
        %v1106 = vrot.slane %v1102, %v1105
        %v1107 = vlaneseq
        %v1108 = vshrl.u32 %v1107, 7
        %v1109 = vsub.s32 1, %v1108
        %v1110 = vrot.slane %v1102, %v1109
        %vm1111 = vcmp.eq.s32.totalorder %v1106, 1
        %vm1112 = vcmp.eq.s32.totalorder %v1110, 1
        %v1113 = vsel %vm1111, %v1098, 0.0
        %v1114 = vsel %vm1112, %v1099, 0.0
        %s1115 = scalar_lea.vmem [#allocation2], 48
        %v1116 = vld [vmem:[%s1115] sm:$0xff]
        %v1118 = vsel %vm443, %v1116, 0
        %1120 = vmatprep.subr.mxu0 %v1114
        %1121 = vmatpush1.msra.mxu0 %v1113
        %1122 = vmatprep.subr.mxu0 0.0
        %1123 = vmatpush1.msra.mxu0 0.0
        %1124 = vmatprep.subr.mxu0 0.0
        %1125 = vmatpush1.msra.mxu0 0.0
        %1126 = vmatprep.subr.mxu0 0.0
        %1127 = vmatpush1.msra.mxu0 0.0
        %1128 = vmatprep.subr.mxu0 0.0
        %1129 = vmatpush1.msra.mxu0 0.0
        %1130 = vmatprep.subr.mxu0 0.0
        %1131 = vmatpush1.msra.mxu0 0.0
        %1132 = vmatprep.subr.mxu0 0.0
        %1133 = vmatpush1.msra.mxu0 0.0
        %1134 = vmatprep.subr.mxu0 0.0
        %1135 = vmatpush1.msra.mxu0 0.0
        %1136 = vmatprep.subr.mxu0 0.0
        %1137 = vmatpush1.msra.mxu0 0.0
        %1138 = vmatprep.subr.mxu0 0.0
        %1139 = vmatpush1.msra.mxu0 0.0
        %1140 = vmatprep.subr.mxu0 0.0
        %1141 = vmatpush1.msra.mxu0 0.0
        %1142 = vmatprep.subr.mxu0 0.0
        %1143 = vmatpush1.msra.mxu0 0.0
        %1144 = vmatprep.subr.mxu0 0.0
        %1145 = vmatpush1.msra.mxu0 0.0
        %1146 = vmatprep.subr.mxu0 0.0
        %1147 = vmatpush1.msra.mxu0 0.0
        %1148 = vmatprep.subr.mxu0 0.0
        %1149 = vmatpush1.msra.mxu0 0.0
        %1150 = vmatprep.subr.mxu0 0.0
        %1151 = vmatpush1.msra.mxu0 0.0
        %1152 = vmatprep.subr.mxu0 0.0
        %1153 = vmatpush1.msra.mxu0 0.0
        %1154 = vmatprep.subr.mxu0 0.0
        %1155 = vmatpush1.msra.mxu0 0.0
        %1156 = vmatprep.subr.mxu0 0.0
        %1157 = vmatpush1.msra.mxu0 0.0
        %1158 = vmatprep.subr.mxu0 0.0
        %1159 = vmatpush1.msra.mxu0 0.0
        %1160 = vmatprep.subr.mxu0 0.0
        %1161 = vmatpush1.msra.mxu0 0.0
        %1162 = vmatprep.subr.mxu0 0.0
        %1163 = vmatpush1.msra.mxu0 0.0
        %1164 = vmatprep.subr.mxu0 0.0
        %1165 = vmatpush1.msra.mxu0 0.0
        %1166 = vmatprep.subr.mxu0 0.0
        %1167 = vmatpush1.msra.mxu0 0.0
        %1168 = vmatprep.subr.mxu0 0.0
        %1169 = vmatpush1.msra.mxu0 0.0
        %1170 = vmatprep.subr.mxu0 0.0
        %1171 = vmatpush1.msra.mxu0 0.0
        %1172 = vmatprep.subr.mxu0 0.0
        %1173 = vmatpush1.msra.mxu0 0.0
        %1174 = vmatprep.subr.mxu0 0.0
        %1175 = vmatpush1.msra.mxu0 0.0
        %1176 = vmatprep.subr.mxu0 0.0
        %1177 = vmatpush1.msra.mxu0 0.0
        %1178 = vmatprep.subr.mxu0 0.0
        %1179 = vmatpush1.msra.mxu0 0.0
        %1180 = vmatprep.subr.mxu0 0.0
        %1181 = vmatpush1.msra.mxu0 0.0
        %1182 = vmatprep.subr.mxu0 0.0
        %1183 = vmatpush1.msra.mxu0 0.0
        %1184 = vmatprep.mubr.f32.mxu0 0.0
        %1185 = vmatmul.mubr.f32.gmra.mrb[0].mxu0 %v1118
        %v1186 = vpop.f32.mrb[0].mxu0
        %v1187 = vadd.f32 0.0, %v1186
        %v1188 = vpop.f32.mrb[0].mxu0
        %v1189 = vadd.f32 0.0, %v1188
        %1190 = vdwg.mxu0
        %v1191 = vadd.f32 %v1091, %v1187
        %v1192 = vadd.f32 %v1092, %v1189
        %1193 = vrot.lane.b32.xlu0 %v434, 112
        %v1194 = vpop.permute.xlu0 %1193
        %1195 = vrot.lane.b32.xlu0 %v435, 112
        %v1196 = vpop.permute.xlu0 %1195
        %vm1197 = vcmp.lt.s32.totalorder %v528, 112
        %v1198 = vsel %vm1197, %v1194, %v1196
        %v1199 = vsel %vm1197, %v1196, %v1194
        %v1200 = vsel %vm1100, 1, 0
        %v1201 = vlaneseq
        %v1202 = vshrl.u32 %v1201, 7
        %v1203 = vsub.s32 0, %v1202
        %v1204 = vrot.slane %v1200, %v1203
        %v1205 = vlaneseq
        %v1206 = vshrl.u32 %v1205, 7
        %v1207 = vsub.s32 1, %v1206
        %v1208 = vrot.slane %v1200, %v1207
        %vm1209 = vcmp.eq.s32.totalorder %v1204, 1
        %vm1210 = vcmp.eq.s32.totalorder %v1208, 1
        %v1211 = vsel %vm1209, %v1198, 0.0
        %v1212 = vsel %vm1210, %v1199, 0.0
        %s1213 = scalar_lea.vmem [#allocation2], 56
        %v1214 = vld [vmem:[%s1213] sm:$0xff]
        %v1216 = vsel %vm443, %v1214, 0
        %1218 = vmatprep.subr.mxu0 %v1212
        %1219 = vmatpush1.msra.mxu0 %v1211
        %1220 = vmatprep.subr.mxu0 0.0
        %1221 = vmatpush1.msra.mxu0 0.0
        %1222 = vmatprep.subr.mxu0 0.0
        %1223 = vmatpush1.msra.mxu0 0.0
        %1224 = vmatprep.subr.mxu0 0.0
        %1225 = vmatpush1.msra.mxu0 0.0
        %1226 = vmatprep.subr.mxu0 0.0
        %1227 = vmatpush1.msra.mxu0 0.0
        %1228 = vmatprep.subr.mxu0 0.0
        %1229 = vmatpush1.msra.mxu0 0.0
        %1230 = vmatprep.subr.mxu0 0.0
        %1231 = vmatpush1.msra.mxu0 0.0
        %1232 = vmatprep.subr.mxu0 0.0
        %1233 = vmatpush1.msra.mxu0 0.0
        %1234 = vmatprep.subr.mxu0 0.0
        %1235 = vmatpush1.msra.mxu0 0.0
        %1236 = vmatprep.subr.mxu0 0.0
        %1237 = vmatpush1.msra.mxu0 0.0
        %1238 = vmatprep.subr.mxu0 0.0
        %1239 = vmatpush1.msra.mxu0 0.0
        %1240 = vmatprep.subr.mxu0 0.0
        %1241 = vmatpush1.msra.mxu0 0.0
        %1242 = vmatprep.subr.mxu0 0.0
        %1243 = vmatpush1.msra.mxu0 0.0
        %1244 = vmatprep.subr.mxu0 0.0
        %1245 = vmatpush1.msra.mxu0 0.0
        %1246 = vmatprep.subr.mxu0 0.0
        %1247 = vmatpush1.msra.mxu0 0.0
        %1248 = vmatprep.subr.mxu0 0.0
        %1249 = vmatpush1.msra.mxu0 0.0
        %1250 = vmatprep.subr.mxu0 0.0
        %1251 = vmatpush1.msra.mxu0 0.0
        %1252 = vmatprep.subr.mxu0 0.0
        %1253 = vmatpush1.msra.mxu0 0.0
        %1254 = vmatprep.subr.mxu0 0.0
        %1255 = vmatpush1.msra.mxu0 0.0
        %1256 = vmatprep.subr.mxu0 0.0
        %1257 = vmatpush1.msra.mxu0 0.0
        %1258 = vmatprep.subr.mxu0 0.0
        %1259 = vmatpush1.msra.mxu0 0.0
        %1260 = vmatprep.subr.mxu0 0.0
        %1261 = vmatpush1.msra.mxu0 0.0
        %1262 = vmatprep.subr.mxu0 0.0
        %1263 = vmatpush1.msra.mxu0 0.0
        %1264 = vmatprep.subr.mxu0 0.0
        %1265 = vmatpush1.msra.mxu0 0.0
        %1266 = vmatprep.subr.mxu0 0.0
        %1267 = vmatpush1.msra.mxu0 0.0
        %1268 = vmatprep.subr.mxu0 0.0
        %1269 = vmatpush1.msra.mxu0 0.0
        %1270 = vmatprep.subr.mxu0 0.0
        %1271 = vmatpush1.msra.mxu0 0.0
        %1272 = vmatprep.subr.mxu0 0.0
        %1273 = vmatpush1.msra.mxu0 0.0
        %1274 = vmatprep.subr.mxu0 0.0
        %1275 = vmatpush1.msra.mxu0 0.0
        %1276 = vmatprep.subr.mxu0 0.0
        %1277 = vmatpush1.msra.mxu0 0.0
        %1278 = vmatprep.subr.mxu0 0.0
        %1279 = vmatpush1.msra.mxu0 0.0
        %1280 = vmatprep.subr.mxu0 0.0
        %1281 = vmatpush1.msra.mxu0 0.0
        %1282 = vmatprep.mubr.f32.mxu0 0.0
        %1283 = vmatmul.mubr.f32.gmra.mrb[0].mxu0 %v1216
        %v1284 = vpop.f32.mrb[0].mxu0
        %v1285 = vadd.f32 0.0, %v1284
        %v1286 = vpop.f32.mrb[0].mxu0
        %v1287 = vadd.f32 0.0, %v1286
        %1288 = vdwg.mxu0
        %v1289 = vadd.f32 %v1191, %v1285
        %v1290 = vadd.f32 %v1192, %v1287
        %1291 = vrot.lane.b32.xlu0 %v434, 111
        %v1292 = vpop.permute.xlu0 %1291
        %1293 = vrot.lane.b32.xlu0 %v435, 111
        %v1294 = vpop.permute.xlu0 %1293
        %vm1295 = vcmp.lt.s32.totalorder %v528, 111
        %v1296 = vsel %vm1295, %v1292, %v1294
        %v1297 = vsel %vm1295, %v1294, %v1292
        %vm1298 = vmand %vm1100, %vm726
        %v1299 = vsel %vm1298, 1, 0
        %v1300 = vlaneseq
        %v1301 = vshrl.u32 %v1300, 7
        %v1302 = vsub.s32 0, %v1301
        %v1303 = vrot.slane %v1299, %v1302
        %v1304 = vlaneseq
        %v1305 = vshrl.u32 %v1304, 7
        %v1306 = vsub.s32 1, %v1305
        %v1307 = vrot.slane %v1299, %v1306
        %vm1308 = vcmp.eq.s32.totalorder %v1303, 1
        %vm1309 = vcmp.eq.s32.totalorder %v1307, 1
        %v1310 = vsel %vm1308, %v1296, 0.0
        %v1311 = vsel %vm1309, %v1297, 0.0
        %s1312 = scalar_lea.vmem [#allocation2], 64
        %v1313 = vld [vmem:[%s1312] sm:$0xff]
        %v1315 = vsel %vm443, %v1313, 0
        %1317 = vmatprep.subr.mxu0 %v1311
        %1318 = vmatpush1.msra.mxu0 %v1310
        %1319 = vmatprep.subr.mxu0 0.0
        %1320 = vmatpush1.msra.mxu0 0.0
        %1321 = vmatprep.subr.mxu0 0.0
        %1322 = vmatpush1.msra.mxu0 0.0
        %1323 = vmatprep.subr.mxu0 0.0
        %1324 = vmatpush1.msra.mxu0 0.0
        %1325 = vmatprep.subr.mxu0 0.0
        %1326 = vmatpush1.msra.mxu0 0.0
        %1327 = vmatprep.subr.mxu0 0.0
        %1328 = vmatpush1.msra.mxu0 0.0
        %1329 = vmatprep.subr.mxu0 0.0
        %1330 = vmatpush1.msra.mxu0 0.0
        %1331 = vmatprep.subr.mxu0 0.0
        %1332 = vmatpush1.msra.mxu0 0.0
        %1333 = vmatprep.subr.mxu0 0.0
        %1334 = vmatpush1.msra.mxu0 0.0
        %1335 = vmatprep.subr.mxu0 0.0
        %1336 = vmatpush1.msra.mxu0 0.0
        %1337 = vmatprep.subr.mxu0 0.0
        %1338 = vmatpush1.msra.mxu0 0.0
        %1339 = vmatprep.subr.mxu0 0.0
        %1340 = vmatpush1.msra.mxu0 0.0
        %1341 = vmatprep.subr.mxu0 0.0
        %1342 = vmatpush1.msra.mxu0 0.0
        %1343 = vmatprep.subr.mxu0 0.0
        %1344 = vmatpush1.msra.mxu0 0.0
        %1345 = vmatprep.subr.mxu0 0.0
        %1346 = vmatpush1.msra.mxu0 0.0
        %1347 = vmatprep.subr.mxu0 0.0
        %1348 = vmatpush1.msra.mxu0 0.0
        %1349 = vmatprep.subr.mxu0 0.0
        %1350 = vmatpush1.msra.mxu0 0.0
        %1351 = vmatprep.subr.mxu0 0.0
        %1352 = vmatpush1.msra.mxu0 0.0
        %1353 = vmatprep.subr.mxu0 0.0
        %1354 = vmatpush1.msra.mxu0 0.0
        %1355 = vmatprep.subr.mxu0 0.0
        %1356 = vmatpush1.msra.mxu0 0.0
        %1357 = vmatprep.subr.mxu0 0.0
        %1358 = vmatpush1.msra.mxu0 0.0
        %1359 = vmatprep.subr.mxu0 0.0
        %1360 = vmatpush1.msra.mxu0 0.0
        %1361 = vmatprep.subr.mxu0 0.0
        %1362 = vmatpush1.msra.mxu0 0.0
        %1363 = vmatprep.subr.mxu0 0.0
        %1364 = vmatpush1.msra.mxu0 0.0
        %1365 = vmatprep.subr.mxu0 0.0
        %1366 = vmatpush1.msra.mxu0 0.0
        %1367 = vmatprep.subr.mxu0 0.0
        %1368 = vmatpush1.msra.mxu0 0.0
        %1369 = vmatprep.subr.mxu0 0.0
        %1370 = vmatpush1.msra.mxu0 0.0
        %1371 = vmatprep.subr.mxu0 0.0
        %1372 = vmatpush1.msra.mxu0 0.0
        %1373 = vmatprep.subr.mxu0 0.0
        %1374 = vmatpush1.msra.mxu0 0.0
        %1375 = vmatprep.subr.mxu0 0.0
        %1376 = vmatpush1.msra.mxu0 0.0
        %1377 = vmatprep.subr.mxu0 0.0
        %1378 = vmatpush1.msra.mxu0 0.0
        %1379 = vmatprep.subr.mxu0 0.0
        %1380 = vmatpush1.msra.mxu0 0.0
        %1381 = vmatprep.mubr.f32.mxu0 0.0
        %1382 = vmatmul.mubr.f32.gmra.mrb[0].mxu0 %v1315
        %v1383 = vpop.f32.mrb[0].mxu0
        %v1384 = vadd.f32 0.0, %v1383
        %v1385 = vpop.f32.mrb[0].mxu0
        %v1386 = vadd.f32 0.0, %v1385
        %1387 = vdwg.mxu0
        %v1388 = vadd.f32 %v1289, %v1384
        %v1389 = vadd.f32 %v1290, %v1386
        %v1390 = vld [vmem:[%s7] sm:$0xff]
        %1392 = vset.pattern.permute.xlu0 0
        %1393 = vperm.xlu0 %1392, %v1390
        %v1394 = vpop.permute.xlu0 %1393
        %v1396 = vadd.f32 %v1388, %v1394
        %v1397 = vadd.f32 %v1389, %v1394
        %v1398 = vmax.f32 %v1396, 0.0
        %v1399 = vmax.f32 %v1397, 0.0
        %1400 = vst [vmem:[%s330] sm:$0xff] %v518
        %1401 = vst [vmem:[%s330 + $0x8] sm:$0xff] %v519
        %1402 = vst [vmem:[%s330 + $0x10] sm:$0xff] %v1398
        %1403 = vst [vmem:[%s330 + $0x18] sm:$0xff] %v1399
        %s1404 = sand.u32 %s209, 1
        %s1405 = scalar_lea.sflag [#allocation4], %s1404
        %s1406 = sand.u32 %s209, 1
        %s1407 = smul.addr %s1406, 32
        %s1408 = scalar_lea.vmem [#allocation5], %s1407
        // Predicated region
        $region57: #{tpu_custom_call.1} parent=51 // pred_check
          %p1409 = pneg %p219
        $region58: #{tpu_custom_call.1} parent=51 // pred_check_branch
          %1411 = sbr.rel (%p1409) target = $region60
        $region59: #{tpu_custom_call.1} parent=51 // pred_region
          %s1412 = smul.u32 2, %s23
          %s1414 = ssub.s32 512, 512
          %1415 = vsyncadd %s1405, %s1414
          %s1416 = smul.addr %s1412, 128
          %s1417 = scalar_lea.hbm %s8, %s1416
          %s1418 = sshll.u32 %s1408, 4
          %s1419 = int_to_ptr.vmem [resolvable:$true] %s1418
          %1424 = dma.vmem_to_hbm [thread:$0]  %s1419, 512, %s1417, %s1405, 256, 512, 16
        $region60: #{tpu_custom_call.1} parent=51 // pred_fallthru
          _
      $region52: #{tpu_custom_call.1} parent=5 // pred_fallthru
        _
      %p1425 = scmp.le.s32.totalorder 2, %s18
      // Predicated region
      $region61: #{tpu_custom_call.1} parent=5 // pred_check
        %p1426 = pneg %p1425
      $region62: #{tpu_custom_call.1} parent=5 // pred_check_branch
        %1428 = sbr.rel (%p1426) target = $region64
      $region63: #{tpu_custom_call.1} parent=5 // pred_region
        %s1429 = ssub.s32 %s18, 2
        // Predicated region
        $region65: #{tpu_custom_call.1} parent=63 // pred_check
          %p1430 = pneg %p225
        $region66: #{tpu_custom_call.1} parent=63 // pred_check_branch
          %1432 = sbr.rel (%p1430) target = $region68
        $region67: #{tpu_custom_call.1} parent=63 // pred_region
          %s1433 = sand.u32 %s210, 1
          %s1434 = scalar_lea.sflag [#allocation4], %s1433
          %s1435 = sand.u32 %s210, 1
          %s1436 = smul.addr %s1435, 32
          %s1437 = scalar_lea.vmem [#allocation5], %s1436
          %1438 = dma.done %s1434, 512
        $region68: #{tpu_custom_call.1} parent=63 // pred_fallthru
          _
      $region64: #{tpu_custom_call.1} parent=5 // pred_fallthru
        _
    $region6: #{tpu_custom_call.1} parent=1 // loop_footer
      %s22 = sadd.s32 1, %s18
    $region7: #{tpu_custom_call.1} parent=1 // loop_footer_branch
      %17 = sbr.rel target = $region3
    $region8: #{tpu_custom_call.1} parent=1 // loop_exit
      _
    %1439 = vsyncpa [#allocation3], 1
    %s1440 = scalar_lea.sflag [#allocation3], 1
    %1441 = vsyncpa %s1440, 1
    %1442 = vsyncpa [#allocation4], 1
    %s1443 = scalar_lea.sflag [#allocation4], 1
    %1444 = vsyncpa %s1443, 1

</llo_original>
